<compile_context>
chip_gen: v6e
topology: v6e:2x2x1
jax: 0.10.0
libtpu: 0.0.40
codegen_flags: <defaults>
</compile_context>

<pallas_src>
import jax
import jax.numpy as jnp
from jax.experimental import pallas as pl
from jax.experimental.pallas import tpu as pltpu

# ---- static hyper-parameters (args.*) -------------------------------------
HIDDEN = 64            # args.hidden_size
OBS_DIM = 32           # cent_obs_space -> 1-D obs => MLPBase
BATCH = 8              # n_rollout_threads * num_agents
RECURRENT_N = 1        # args.recurrent_N (single GRU layer)
CASCADE_ONE = 3        # args.cascade_iterations1
CASCADE_RATE_ONE = 1.0 / CASCADE_ONE
LN_EPS = 1e-5          # torch.nn.LayerNorm default eps

LANE = 128
GATE_PITCH = 128       # each GRU gate in its own 128-lane column block
OUT_W = 2 * HIDDEN     # fused output: h in lanes 0:H, value broadcast over H:2H

# activation buffer lane offsets (all multiples of 128 -> aligned slices)
A_OBS, A_H, A_MASK = 0, 128, 256
ACT_W = 3 * LANE

# weight-table column blocks (all starts multiples of 128)
C_GRU = 0                       # gate blocks [r | z | n], each GATE_PITCH wide
C_OUT = 3 * GATE_PITCH          # 384: output head (rows 0:H -> [0|wv_rep], rows H:2H -> [I|0])
C_MLP = C_OUT + OUT_W           # 512: w1 in rows 0:OBS_DIM, w2 in rows H:2H
WTAB_W = C_MLP + HIDDEN         # 576

# packed (16, 128) small-vector-parameter table row indices
R_FN_G, R_FN_B = 0, 1
R_B1, R_LN1_G, R_LN1_B = 2, 3, 4
R_B2, R_LN2_G, R_LN2_B = 5, 6, 7
R_LNG_G, R_LNG_B = 8, 9
R_GRU_BR, R_GRU_BZ, R_GRU_BIN, R_GRU_BHN = 10, 11, 12, 13
R_BVROW = 14            # full 128-lane row: 0 in lanes 0:H, v_out bias in lanes H:2H
VEC_ROWS = 16


def _layernorm(x, gamma, beta):
    # One-pass form keeps the two cross-lane reductions independent; clamp the
    # variance so f32 cancellation can never feed a negative value into rsqrt.
    n = x.shape[-1]
    s1 = jnp.sum(x, axis=-1, keepdims=True)
    s2 = jnp.sum(x * x, axis=-1, keepdims=True)
    mu = s1 * (1.0 / n)
    var = jnp.maximum(s2 * (1.0 / n) - mu * mu, 0.0)
    return (x - mu) * jax.lax.rsqrt(var + LN_EPS) * gamma + beta


def critic_meta_kernel(act_ref, vec_ref, wtab_ref, out_ref):
    H, GP = HIDDEN, GATE_PITCH
    B = act_ref.shape[0]

    # ---- hoisted, loop-invariant parameter loads (single packed table) ----
    fn_g = vec_ref[R_FN_G:R_FN_G + 1, 0:OBS_DIM]
    fn_b = vec_ref[R_FN_B:R_FN_B + 1, 0:OBS_DIM]
    b1 = vec_ref[R_B1:R_B1 + 1, 0:H]
    ln1_g = vec_ref[R_LN1_G:R_LN1_G + 1, 0:H]
    ln1_b = vec_ref[R_LN1_B:R_LN1_B + 1, 0:H]
    b2 = vec_ref[R_B2:R_B2 + 1, 0:H]
    ln2_g = vec_ref[R_LN2_G:R_LN2_G + 1, 0:H]
    ln2_b = vec_ref[R_LN2_B:R_LN2_B + 1, 0:H]
    lng_g = vec_ref[R_LNG_G:R_LNG_G + 1, 0:H]
    lng_b = vec_ref[R_LNG_B:R_LNG_B + 1, 0:H]
    b_r = vec_ref[R_GRU_BR:R_GRU_BR + 1, 0:H]
    b_z = vec_ref[R_GRU_BZ:R_GRU_BZ + 1, 0:H]
    b_in = vec_ref[R_GRU_BIN:R_GRU_BIN + 1, 0:H]
    b_hn = vec_ref[R_GRU_BHN:R_GRU_BHN + 1, 0:H]
    bv_row = vec_ref[R_BVROW:R_BVROW + 1, :]                    # (1, 128)

    # GRU weight halves: rows 0:H multiply feats, rows H:2H multiply h*mask.
    w_x = wtab_ref[0:H, C_GRU:C_GRU + 3 * GP]                   # (H, 384)
    w_h = wtab_ref[H:2 * H, C_GRU:C_GRU + 3 * GP]               # (H, 384)

    # ---- activations: one lane-dense buffer, 128-aligned slice starts ----
    obs = act_ref[:, A_OBS:A_OBS + OBS_DIM]
    h = act_ref[:, A_H:A_H + H]
    maskH = act_ref[:, A_MASK:A_MASK + H]                       # pre-broadcast on host

    # ---------------- MLPBase ----------------
    x = _layernorm(obs, fn_g, fn_b)                                             # feature_norm
    x = jnp.maximum(jnp.dot(x, wtab_ref[0:OBS_DIM, C_MLP:C_MLP + H],
                            preferred_element_type=jnp.float32) + b1, 0.0)
    x = _layernorm(x, ln1_g, ln1_b)                                             # fc1
    x = jnp.maximum(jnp.dot(x, wtab_ref[H:2 * H, C_MLP:C_MLP + H],
                            preferred_element_type=jnp.float32) + b2, 0.0)
    x = _layernorm(x, ln2_g, ln2_b)                                             # fc_h (layer_N = 1)

    # ---------------- cascaded meta-GRU ----------------
    # TODO(synk): RNNLayer_Meta source not provided; implemented as a single-step
    # PyTorch-layout GRU (gate order r|z|n) + LayerNorm, with the cascade output
    # blended at rate cascade_rate_one across the cascade_one iterations.
    feats = x
    cascade1 = jnp.zeros_like(feats)
    for j in range(CASCADE_ONE):                          # statically unrolled
        hm = h * maskH
        g_x = jnp.dot(feats, w_x, preferred_element_type=jnp.float32)   # (B, 3*GP)
        g_h = jnp.dot(hm, w_h, preferred_element_type=jnp.float32)      # (B, 3*GP)
        r = jax.nn.sigmoid(g_x[:, 0:H] + g_h[:, 0:H] + b_r)
        z = jax.nn.sigmoid(g_x[:, GP:GP + H] + g_h[:, GP:GP + H] + b_z)
        n = jnp.tanh(g_x[:, 2 * GP:2 * GP + H] + b_in
                     + r * (g_h[:, 2 * GP:2 * GP + H] + b_hn))
        h = (1.0 - z) * n + z * hm
        out = _layernorm(h, lng_g, lng_b)
        if j == 0:
            cascade1 = CASCADE_RATE_ONE * out
        else:
            cascade1 = (1.0 - CASCADE_RATE_ONE) * cascade1 + CASCADE_RATE_ONE * out
        feats = cascade1

    # ---------------- v_out + output assembly on the (idle) MXU ----------------
    # rows 0:H of the C_OUT block:  [zeros | wv replicated]  (multiplies feats)
    # rows H:2H of the C_OUT block: [identity | zeros]       (multiplies h)
    out_ref[...] = (
        jnp.dot(feats, wtab_ref[0:H, C_OUT:C_OUT + OUT_W],
                preferred_element_type=jnp.float32)
        + jnp.dot(h, wtab_ref[H:2 * H, C_OUT:C_OUT + OUT_W],
                  preferred_element_type=jnp.float32)
        + bv_row)


# --------------------------- parameters -------------------------------------
def init_params(key):
    ks = jax.random.split(key, 5)
    H = HIDDEN

    def w(k, shp):
        fan_in, fan_out = shp
        scale = (2.0 / (fan_in + fan_out)) ** 0.5   # xavier-style, deterministic
        return jax.random.normal(k, shp, jnp.float32) * scale

    return dict(
        fn_g=jnp.ones((OBS_DIM,), jnp.float32), fn_b=jnp.zeros((OBS_DIM,), jnp.float32),
        w1=w(ks[0], (OBS_DIM, H)), b1=jnp.zeros((H,), jnp.float32),
        ln1_g=jnp.ones((H,), jnp.float32), ln1_b=jnp.zeros((H,), jnp.float32),
        w2=w(ks[1], (H, H)), b2=jnp.zeros((H,), jnp.float32),
        ln2_g=jnp.ones((H,), jnp.float32), ln2_b=jnp.zeros((H,), jnp.float32),
        wih=w(ks[2], (H, 3 * H)), bih=jnp.zeros((3 * H,), jnp.float32),
        whh=w(ks[3], (H, 3 * H)), bhh=jnp.zeros((3 * H,), jnp.float32),
        lng_g=jnp.ones((H,), jnp.float32), lng_b=jnp.zeros((H,), jnp.float32),
        wv=w(ks[4], (H, 1)), bv=jnp.zeros((1,), jnp.float32),
    )


def pack_params(p):
    """Pack small vector params into one (16,128) table and all matrices into one
    (128, 576) weight table (done once, on the host)."""
    H, GP = HIDDEN, GATE_PITCH

    # ---- small-vector table ----
    vec = jnp.zeros((VEC_ROWS, 128), jnp.float32)

    def setrow(v, row, arr):
        return v.at[row, 0:arr.shape[0]].set(arr)

    vec = setrow(vec, R_FN_G, p['fn_g']);   vec = setrow(vec, R_FN_B, p['fn_b'])
    vec = setrow(vec, R_B1, p['b1'])
    vec = setrow(vec, R_LN1_G, p['ln1_g']); vec = setrow(vec, R_LN1_B, p['ln1_b'])
    vec = setrow(vec, R_B2, p['b2'])
    vec = setrow(vec, R_LN2_G, p['ln2_g']); vec = setrow(vec, R_LN2_B, p['ln2_b'])
    vec = setrow(vec, R_LNG_G, p['lng_g']); vec = setrow(vec, R_LNG_B, p['lng_b'])
    # GRU biases: r/z biases pre-summed; the n-gate recurrent bias stays separate
    # (it sits inside the r-modulated term).
    b_ir, b_iz, b_in = p['bih'][0:H], p['bih'][H:2 * H], p['bih'][2 * H:3 * H]
    b_hr, b_hz, b_hn = p['bhh'][0:H], p['bhh'][H:2 * H], p['bhh'][2 * H:3 * H]
    vec = setrow(vec, R_GRU_BR, b_ir + b_hr)
    vec = setrow(vec, R_GRU_BZ, b_iz + b_hz)
    vec = setrow(vec, R_GRU_BIN, b_in)
    vec = setrow(vec, R_GRU_BHN, b_hn)
    vec = vec.at[R_BVROW, H:2 * H].set(jnp.full((H,), p['bv'][0], jnp.float32))

    # ---- single weight table: rows 0:H = "feats" operand, rows H:2H = "h" operand ----
    wtab = jnp.zeros((2 * H, WTAB_W), jnp.float32)
    wih, whh = p['wih'], p['whh']
    # GRU gate columns (pitch 128): [r | z | n]; i_n and h_n share the n block but
    # live in different row halves (so the separate dots keep them separate).
    wtab = wtab.at[0:H, 0:H].set(wih[:, 0:H])
    wtab = wtab.at[0:H, GP:GP + H].set(wih[:, H:2 * H])
    wtab = wtab.at[0:H, 2 * GP:2 * GP + H].set(wih[:, 2 * H:3 * H])
    wtab = wtab.at[H:2 * H, 0:H].set(whh[:, 0:H])
    wtab = wtab.at[H:2 * H, GP:GP + H].set(whh[:, H:2 * H])
    wtab = wtab.at[H:2 * H, 2 * GP:2 * GP + H].set(whh[:, 2 * H:3 * H])
    # Output head: feats -> value broadcast over lanes H:2H, h -> identity into lanes 0:H.
    wtab = wtab.at[0:H, C_OUT + H:C_OUT + 2 * H].set(jnp.broadcast_to(p['wv'], (H, H)))
    wtab = wtab.at[H:2 * H, C_OUT:C_OUT + H].set(jnp.eye(H, dtype=jnp.float32))
    # MLPBase weights.
    wtab = wtab.at[0:OBS_DIM, C_MLP:C_MLP + H].set(p['w1'])
    wtab = wtab.at[H:2 * H, C_MLP:C_MLP + H].set(p['w2'])

    return dict(vec=vec, wtab=wtab)


# --------------------------- wrapper -----------------------------------------
@jax.jit
def r_critic_meta_forward(packed, cent_obs, rnn_states, masks):
    """Returns (values (1,B,1), rnn_states (recurrent_N, B, H))."""
    B = cent_obs.shape[0]
    h0 = rnn_states.reshape(B, HIDDEN).astype(jnp.float32)      # assumes recurrent_N == 1

    # One lane-dense activation buffer: [obs | h0 | mask broadcast], 128-aligned blocks.
    act = jnp.zeros((B, ACT_W), jnp.float32)
    act = act.at[:, A_OBS:A_OBS + OBS_DIM].set(cent_obs.astype(jnp.float32))
    act = act.at[:, A_H:A_H + HIDDEN].set(h0)
    act = act.at[:, A_MASK:A_MASK + HIDDEN].set(
        jnp.broadcast_to(masks.astype(jnp.float32), (B, HIDDEN)))

    vmem = pl.BlockSpec(memory_space=pltpu.MemorySpace.VMEM)    # whole-array blocks (tiny problem)
    # Gridless single-core launch on purpose: at B=8 adding a batch grid axis or a
    # TensorCore-parallel split only adds per-step / cross-core overhead.
    out = pl.pallas_call(
        critic_meta_kernel,
        out_shape=jax.ShapeDtypeStruct((B, OUT_W), jnp.float32),
        in_specs=[vmem, vmem, vmem],
        out_specs=vmem,
    )(act, packed['vec'], packed['wtab'])

    values = out[:, HIDDEN:HIDDEN + 1].reshape(1, B, 1)                                 # v_out(unsqueeze(0))
    rnn_states_out = out[:, 0:HIDDEN].reshape(B, RECURRENT_N, HIDDEN).transpose(1, 0, 2)  # permute(1,0,2)
    return values, rnn_states_out


# --------------------------- pure-JAX reference -------------------------------
def reference_forward(p, cent_obs, rnn_states, masks):
    hp = jax.lax.Precision.HIGHEST

    def ln(x, g, b):
        mu = jnp.mean(x, axis=-1, keepdims=True)
        var = jnp.mean(jnp.square(x - mu), axis=-1, keepdims=True)
        return (x - mu) * jax.lax.rsqrt(var + LN_EPS) * g + b

    H = HIDDEN
    x = ln(cent_obs, p['fn_g'], p['fn_b'])
    x = jnp.maximum(jnp.dot(x, p['w1'], precision=hp) + p['b1'], 0.0)
    x = ln(x, p['ln1_g'], p['ln1_b'])
    x = jnp.maximum(jnp.dot(x, p['w2'], precision=hp) + p['b2'], 0.0)
    x = ln(x, p['ln2_g'], p['ln2_b'])

    h = rnn_states.reshape(-1, H)
    feats, casc = x, None
    for j in range(CASCADE_ONE):
        hm = h * masks
        gi = jnp.dot(feats, p['wih'], precision=hp) + p['bih']
        gh = jnp.dot(hm, p['whh'], precision=hp) + p['bhh']
        r = jax.nn.sigmoid(gi[:, 0:H] + gh[:, 0:H])
        z = jax.nn.sigmoid(gi[:, H:2 * H] + gh[:, H:2 * H])
        n = jnp.tanh(gi[:, 2 * H:3 * H] + r * gh[:, 2 * H:3 * H])
        h = (1.0 - z) * n + z * hm
        out = ln(h, p['lng_g'], p['lng_b'])
        casc = CASCADE_RATE_ONE * out if j == 0 else (1.0 - CASCADE_RATE_ONE) * casc + CASCADE_RATE_ONE * out
        feats = casc
    values = (jnp.dot(feats, p['wv'], precision=hp) + p['bv']).reshape(1, -1, 1)
    rnn_out = h.reshape(-1, RECURRENT_N, H).transpose(1, 0, 2)
    return values, rnn_out


if __name__ == "__main__":
    key = jax.random.PRNGKey(0)
    k_obs, k_h, k_p = jax.random.split(key, 3)

    cent_obs = jax.random.normal(k_obs, (BATCH, OBS_DIM), jnp.float32)
    rnn_states = jax.random.normal(k_h, (BATCH, RECURRENT_N, HIDDEN), jnp.float32)
    masks = jnp.ones((BATCH, 1), jnp.float32)

    params = init_params(k_p)
    packed = pack_params(params)

    values, rnn_states_out = r_critic_meta_forward(packed, cent_obs, rnn_states, masks)
    jax.block_until_ready((values, rnn_states_out))

    assert values.shape == (1, BATCH, 1), values.shape
    assert rnn_states_out.shape == (RECURRENT_N, BATCH, HIDDEN), rnn_states_out.shape
    assert bool(jnp.all(jnp.isfinite(values))) and bool(jnp.all(jnp.isfinite(rnn_states_out)))

    v_ref, h_ref = reference_forward(params, cent_obs, rnn_states, masks)
    assert bool(jnp.allclose(values, v_ref, rtol=1e-2, atol=1e-2)), "value mismatch vs reference"
    assert bool(jnp.allclose(rnn_states_out, h_ref, rtol=1e-2, atol=1e-2)), "hidden-state mismatch vs reference"

    print("KERNEL_OK")
</pallas_src>

<mosaic_0001>
module attributes {stable_mosaic.version = 11 : i64} {
  func.func @critic_meta_kernel(%arg0: memref<8x384xf32, #tpu.memory_space<vmem>>, %arg1: memref<16x128xf32, #tpu.memory_space<vmem>>, %arg2: memref<128x576xf32, #tpu.memory_space<vmem>>, %arg3: memref<8x128xf32, #tpu.memory_space<vmem>>) attributes {dimension_semantics = [], scalar_prefetch = 0 : i64, scratch_operands = 0 : i64, tpu.core_type = #tpu.core_type<tc>} {
    %c0 = arith.constant 0 : index
    %c0_0 = arith.constant 0 : index
    %0 = vector.load %arg1[%c0, %c0_0] : memref<16x128xf32, #tpu.memory_space<vmem>>, vector<1x32xf32>
    %c1 = arith.constant 1 : index
    %c0_1 = arith.constant 0 : index
    %1 = vector.load %arg1[%c1, %c0_1] : memref<16x128xf32, #tpu.memory_space<vmem>>, vector<1x32xf32>
    %c2 = arith.constant 2 : index
    %c0_2 = arith.constant 0 : index
    %2 = vector.load %arg1[%c2, %c0_2] : memref<16x128xf32, #tpu.memory_space<vmem>>, vector<1x64xf32>
    %c3 = arith.constant 3 : index
    %c0_3 = arith.constant 0 : index
    %3 = vector.load %arg1[%c3, %c0_3] : memref<16x128xf32, #tpu.memory_space<vmem>>, vector<1x64xf32>
    %c4 = arith.constant 4 : index
    %c0_4 = arith.constant 0 : index
    %4 = vector.load %arg1[%c4, %c0_4] : memref<16x128xf32, #tpu.memory_space<vmem>>, vector<1x64xf32>
    %c5 = arith.constant 5 : index
    %c0_5 = arith.constant 0 : index
    %5 = vector.load %arg1[%c5, %c0_5] : memref<16x128xf32, #tpu.memory_space<vmem>>, vector<1x64xf32>
    %c6 = arith.constant 6 : index
    %c0_6 = arith.constant 0 : index
    %6 = vector.load %arg1[%c6, %c0_6] : memref<16x128xf32, #tpu.memory_space<vmem>>, vector<1x64xf32>
    %c7 = arith.constant 7 : index
    %c0_7 = arith.constant 0 : index
    %7 = vector.load %arg1[%c7, %c0_7] : memref<16x128xf32, #tpu.memory_space<vmem>>, vector<1x64xf32>
    %c8 = arith.constant 8 : index
    %c0_8 = arith.constant 0 : index
    %8 = vector.load %arg1[%c8, %c0_8] : memref<16x128xf32, #tpu.memory_space<vmem>>, vector<1x64xf32>
    %c9 = arith.constant 9 : index
    %c0_9 = arith.constant 0 : index
    %9 = vector.load %arg1[%c9, %c0_9] : memref<16x128xf32, #tpu.memory_space<vmem>>, vector<1x64xf32>
    %c10 = arith.constant 10 : index
    %c0_10 = arith.constant 0 : index
    %10 = vector.load %arg1[%c10, %c0_10] : memref<16x128xf32, #tpu.memory_space<vmem>>, vector<1x64xf32>
    %c11 = arith.constant 11 : index
    %c0_11 = arith.constant 0 : index
    %11 = vector.load %arg1[%c11, %c0_11] : memref<16x128xf32, #tpu.memory_space<vmem>>, vector<1x64xf32>
    %c12 = arith.constant 12 : index
    %c0_12 = arith.constant 0 : index
    %12 = vector.load %arg1[%c12, %c0_12] : memref<16x128xf32, #tpu.memory_space<vmem>>, vector<1x64xf32>
    %c13 = arith.constant 13 : index
    %c0_13 = arith.constant 0 : index
    %13 = vector.load %arg1[%c13, %c0_13] : memref<16x128xf32, #tpu.memory_space<vmem>>, vector<1x64xf32>
    %c14 = arith.constant 14 : index
    %c0_14 = arith.constant 0 : index
    %14 = vector.load %arg1[%c14, %c0_14] : memref<16x128xf32, #tpu.memory_space<vmem>>, vector<1x128xf32>
    %c0_15 = arith.constant 0 : index
    %c0_16 = arith.constant 0 : index
    %15 = vector.load %arg2[%c0_15, %c0_16] : memref<128x576xf32, #tpu.memory_space<vmem>>, vector<64x384xf32>
    %c64 = arith.constant 64 : index
    %c0_17 = arith.constant 0 : index
    %16 = vector.load %arg2[%c64, %c0_17] : memref<128x576xf32, #tpu.memory_space<vmem>>, vector<64x384xf32>
    %c0_18 = arith.constant 0 : index
    %c0_19 = arith.constant 0 : index
    %17 = vector.load %arg0[%c0_18, %c0_19] : memref<8x384xf32, #tpu.memory_space<vmem>>, vector<8x32xf32>
    %c0_20 = arith.constant 0 : index
    %c128 = arith.constant 128 : index
    %18 = vector.load %arg0[%c0_20, %c128] : memref<8x384xf32, #tpu.memory_space<vmem>>, vector<8x64xf32>
    %c0_21 = arith.constant 0 : index
    %c256 = arith.constant 256 : index
    %19 = vector.load %arg0[%c0_21, %c256] : memref<8x384xf32, #tpu.memory_space<vmem>>, vector<8x64xf32>
    %cst = arith.constant dense<0.000000e+00> : vector<8xf32>
    %20 = vector.multi_reduction <add>, %17, %cst [1] : vector<8x32xf32> to vector<8xf32>
    %21 = vector.shape_cast %20 : vector<8xf32> to vector<8x1xf32>
    %22 = arith.mulf %17, %17 : vector<8x32xf32>
    %cst_22 = arith.constant dense<0.000000e+00> : vector<8xf32>
    %23 = vector.multi_reduction <add>, %22, %cst_22 [1] : vector<8x32xf32> to vector<8xf32>
    %24 = vector.shape_cast %23 : vector<8xf32> to vector<8x1xf32>
    %cst_23 = arith.constant 3.125000e-02 : f32
    %25 = vector.broadcast %cst_23 : f32 to vector<8x1xf32>
    %26 = arith.mulf %21, %25 : vector<8x1xf32>
    %cst_24 = arith.constant 3.125000e-02 : f32
    %27 = vector.broadcast %cst_24 : f32 to vector<8x1xf32>
    %28 = arith.mulf %24, %27 : vector<8x1xf32>
    %29 = arith.mulf %26, %26 : vector<8x1xf32>
    %30 = arith.subf %28, %29 : vector<8x1xf32>
    %cst_25 = arith.constant 0.000000e+00 : f32
    %31 = vector.broadcast %cst_25 : f32 to vector<8x1xf32>
    %32 = arith.maximumf %30, %31 : vector<8x1xf32>
    %33 = vector.broadcast %26 : vector<8x1xf32> to vector<8x32xf32>
    %34 = arith.subf %17, %33 : vector<8x32xf32>
    %cst_26 = arith.constant 9.99999974E-6 : f32
    %35 = vector.broadcast %cst_26 : f32 to vector<8x1xf32>
    %36 = arith.addf %32, %35 : vector<8x1xf32>
    %37 = math.rsqrt %36 : vector<8x1xf32>
    %38 = vector.broadcast %37 : vector<8x1xf32> to vector<8x32xf32>
    %39 = arith.mulf %34, %38 : vector<8x32xf32>
    %40 = vector.broadcast %0 : vector<1x32xf32> to vector<8x32xf32>
    %41 = arith.mulf %39, %40 : vector<8x32xf32>
    %42 = vector.broadcast %1 : vector<1x32xf32> to vector<8x32xf32>
    %43 = arith.addf %41, %42 : vector<8x32xf32>
    %c0_27 = arith.constant 0 : index
    %c512 = arith.constant 512 : index
    %44 = vector.load %arg2[%c0_27, %c512] : memref<128x576xf32, #tpu.memory_space<vmem>>, vector<32x64xf32>
    %cst_28 = arith.constant dense<0.000000e+00> : vector<8x64xf32>
    %45 = tpu.matmul %43, %44, %cst_28 {dimension_numbers = #tpu.dot_dimension_numbers<[1], [0], [0], [1], [0, 0, 1, 1], [], []>} : vector<8x32xf32>, vector<32x64xf32>, vector<8x64xf32> -> vector<8x64xf32>
    %46 = vector.broadcast %2 : vector<1x64xf32> to vector<8x64xf32>
    %47 = arith.addf %45, %46 : vector<8x64xf32>
    %cst_29 = arith.constant 0.000000e+00 : f32
    %48 = vector.broadcast %cst_29 : f32 to vector<8x64xf32>
    %49 = arith.maximumf %47, %48 : vector<8x64xf32>
    %cst_30 = arith.constant dense<0.000000e+00> : vector<8xf32>
    %50 = vector.multi_reduction <add>, %49, %cst_30 [1] : vector<8x64xf32> to vector<8xf32>
    %51 = vector.shape_cast %50 : vector<8xf32> to vector<8x1xf32>
    %52 = arith.mulf %49, %49 : vector<8x64xf32>
    %cst_31 = arith.constant dense<0.000000e+00> : vector<8xf32>
    %53 = vector.multi_reduction <add>, %52, %cst_31 [1] : vector<8x64xf32> to vector<8xf32>
    %54 = vector.shape_cast %53 : vector<8xf32> to vector<8x1xf32>
    %cst_32 = arith.constant 1.562500e-02 : f32
    %55 = vector.broadcast %cst_32 : f32 to vector<8x1xf32>
    %56 = arith.mulf %51, %55 : vector<8x1xf32>
    %cst_33 = arith.constant 1.562500e-02 : f32
    %57 = vector.broadcast %cst_33 : f32 to vector<8x1xf32>
    %58 = arith.mulf %54, %57 : vector<8x1xf32>
    %59 = arith.mulf %56, %56 : vector<8x1xf32>
    %60 = arith.subf %58, %59 : vector<8x1xf32>
    %cst_34 = arith.constant 0.000000e+00 : f32
    %61 = vector.broadcast %cst_34 : f32 to vector<8x1xf32>
    %62 = arith.maximumf %60, %61 : vector<8x1xf32>
    %63 = vector.broadcast %56 : vector<8x1xf32> to vector<8x64xf32>
    %64 = arith.subf %49, %63 : vector<8x64xf32>
    %cst_35 = arith.constant 9.99999974E-6 : f32
    %65 = vector.broadcast %cst_35 : f32 to vector<8x1xf32>
    %66 = arith.addf %62, %65 : vector<8x1xf32>
    %67 = math.rsqrt %66 : vector<8x1xf32>
    %68 = vector.broadcast %67 : vector<8x1xf32> to vector<8x64xf32>
    %69 = arith.mulf %64, %68 : vector<8x64xf32>
    %70 = vector.broadcast %3 : vector<1x64xf32> to vector<8x64xf32>
    %71 = arith.mulf %69, %70 : vector<8x64xf32>
    %72 = vector.broadcast %4 : vector<1x64xf32> to vector<8x64xf32>
    %73 = arith.addf %71, %72 : vector<8x64xf32>
    %c64_36 = arith.constant 64 : index
    %c512_37 = arith.constant 512 : index
    %74 = vector.load %arg2[%c64_36, %c512_37] : memref<128x576xf32, #tpu.memory_space<vmem>>, vector<64x64xf32>
    %cst_38 = arith.constant dense<0.000000e+00> : vector<8x64xf32>
    %75 = tpu.matmul %73, %74, %cst_38 {dimension_numbers = #tpu.dot_dimension_numbers<[1], [0], [0], [1], [0, 0, 1, 1], [], []>} : vector<8x64xf32>, vector<64x64xf32>, vector<8x64xf32> -> vector<8x64xf32>
    %76 = vector.broadcast %5 : vector<1x64xf32> to vector<8x64xf32>
    %77 = arith.addf %75, %76 : vector<8x64xf32>
    %cst_39 = arith.constant 0.000000e+00 : f32
    %78 = vector.broadcast %cst_39 : f32 to vector<8x64xf32>
    %79 = arith.maximumf %77, %78 : vector<8x64xf32>
    %cst_40 = arith.constant dense<0.000000e+00> : vector<8xf32>
    %80 = vector.multi_reduction <add>, %79, %cst_40 [1] : vector<8x64xf32> to vector<8xf32>
    %81 = vector.shape_cast %80 : vector<8xf32> to vector<8x1xf32>
    %82 = arith.mulf %79, %79 : vector<8x64xf32>
    %cst_41 = arith.constant dense<0.000000e+00> : vector<8xf32>
    %83 = vector.multi_reduction <add>, %82, %cst_41 [1] : vector<8x64xf32> to vector<8xf32>
    %84 = vector.shape_cast %83 : vector<8xf32> to vector<8x1xf32>
    %cst_42 = arith.constant 1.562500e-02 : f32
    %85 = vector.broadcast %cst_42 : f32 to vector<8x1xf32>
    %86 = arith.mulf %81, %85 : vector<8x1xf32>
    %cst_43 = arith.constant 1.562500e-02 : f32
    %87 = vector.broadcast %cst_43 : f32 to vector<8x1xf32>
    %88 = arith.mulf %84, %87 : vector<8x1xf32>
    %89 = arith.mulf %86, %86 : vector<8x1xf32>
    %90 = arith.subf %88, %89 : vector<8x1xf32>
    %cst_44 = arith.constant 0.000000e+00 : f32
    %91 = vector.broadcast %cst_44 : f32 to vector<8x1xf32>
    %92 = arith.maximumf %90, %91 : vector<8x1xf32>
    %93 = vector.broadcast %86 : vector<8x1xf32> to vector<8x64xf32>
    %94 = arith.subf %79, %93 : vector<8x64xf32>
    %cst_45 = arith.constant 9.99999974E-6 : f32
    %95 = vector.broadcast %cst_45 : f32 to vector<8x1xf32>
    %96 = arith.addf %92, %95 : vector<8x1xf32>
    %97 = math.rsqrt %96 : vector<8x1xf32>
    %98 = vector.broadcast %97 : vector<8x1xf32> to vector<8x64xf32>
    %99 = arith.mulf %94, %98 : vector<8x64xf32>
    %100 = vector.broadcast %6 : vector<1x64xf32> to vector<8x64xf32>
    %101 = arith.mulf %99, %100 : vector<8x64xf32>
    %102 = vector.broadcast %7 : vector<1x64xf32> to vector<8x64xf32>
    %103 = arith.addf %101, %102 : vector<8x64xf32>
    %104 = arith.mulf %18, %19 : vector<8x64xf32>
    %cst_46 = arith.constant dense<0.000000e+00> : vector<8x384xf32>
    %105 = tpu.matmul %103, %15, %cst_46 {dimension_numbers = #tpu.dot_dimension_numbers<[1], [0], [0], [1], [0, 0, 1, 1], [], []>} : vector<8x64xf32>, vector<64x384xf32>, vector<8x384xf32> -> vector<8x384xf32>
    %cst_47 = arith.constant dense<0.000000e+00> : vector<8x384xf32>
    %106 = tpu.matmul %104, %16, %cst_47 {dimension_numbers = #tpu.dot_dimension_numbers<[1], [0], [0], [1], [0, 0, 1, 1], [], []>} : vector<8x64xf32>, vector<64x384xf32>, vector<8x384xf32> -> vector<8x384xf32>
    %107 = vector.extract_strided_slice %105 {offsets = [0, 0], sizes = [8, 64], strides = [1, 1]} : vector<8x384xf32> to vector<8x64xf32>
    %108 = vector.extract_strided_slice %106 {offsets = [0, 0], sizes = [8, 64], strides = [1, 1]} : vector<8x384xf32> to vector<8x64xf32>
    %109 = arith.addf %107, %108 : vector<8x64xf32>
    %110 = vector.broadcast %10 : vector<1x64xf32> to vector<8x64xf32>
    %111 = arith.addf %109, %110 : vector<8x64xf32>
    %112 = arith.negf %111 : vector<8x64xf32>
    %113 = math.exp %112 : vector<8x64xf32>
    %cst_48 = arith.constant 1.000000e+00 : f32
    %114 = vector.broadcast %cst_48 : f32 to vector<8x64xf32>
    %115 = arith.addf %114, %113 : vector<8x64xf32>
    %116 = arith.divf %114, %115 : vector<8x64xf32>
    %117 = vector.extract_strided_slice %105 {offsets = [0, 128], sizes = [8, 64], strides = [1, 1]} : vector<8x384xf32> to vector<8x64xf32>
    %118 = vector.extract_strided_slice %106 {offsets = [0, 128], sizes = [8, 64], strides = [1, 1]} : vector<8x384xf32> to vector<8x64xf32>
    %119 = arith.addf %117, %118 : vector<8x64xf32>
    %120 = vector.broadcast %11 : vector<1x64xf32> to vector<8x64xf32>
    %121 = arith.addf %119, %120 : vector<8x64xf32>
    %122 = arith.negf %121 : vector<8x64xf32>
    %123 = math.exp %122 : vector<8x64xf32>
    %cst_49 = arith.constant 1.000000e+00 : f32
    %124 = vector.broadcast %cst_49 : f32 to vector<8x64xf32>
    %125 = arith.addf %124, %123 : vector<8x64xf32>
    %126 = arith.divf %124, %125 : vector<8x64xf32>
    %127 = vector.extract_strided_slice %105 {offsets = [0, 256], sizes = [8, 64], strides = [1, 1]} : vector<8x384xf32> to vector<8x64xf32>
    %128 = vector.broadcast %12 : vector<1x64xf32> to vector<8x64xf32>
    %129 = arith.addf %127, %128 : vector<8x64xf32>
    %130 = vector.extract_strided_slice %106 {offsets = [0, 256], sizes = [8, 64], strides = [1, 1]} : vector<8x384xf32> to vector<8x64xf32>
    %131 = vector.broadcast %13 : vector<1x64xf32> to vector<8x64xf32>
    %132 = arith.addf %130, %131 : vector<8x64xf32>
    %133 = arith.mulf %116, %132 : vector<8x64xf32>
    %134 = arith.addf %129, %133 : vector<8x64xf32>
    %135 = math.tanh %134 : vector<8x64xf32>
    %cst_50 = arith.constant 1.000000e+00 : f32
    %136 = vector.broadcast %cst_50 : f32 to vector<8x64xf32>
    %137 = arith.subf %136, %126 : vector<8x64xf32>
    %138 = arith.mulf %137, %135 : vector<8x64xf32>
    %139 = arith.mulf %126, %104 : vector<8x64xf32>
    %140 = arith.addf %138, %139 : vector<8x64xf32>
    %cst_51 = arith.constant dense<0.000000e+00> : vector<8xf32>
    %141 = vector.multi_reduction <add>, %140, %cst_51 [1] : vector<8x64xf32> to vector<8xf32>
    %142 = vector.shape_cast %141 : vector<8xf32> to vector<8x1xf32>
    %143 = arith.mulf %140, %140 : vector<8x64xf32>
    %cst_52 = arith.constant dense<0.000000e+00> : vector<8xf32>
    %144 = vector.multi_reduction <add>, %143, %cst_52 [1] : vector<8x64xf32> to vector<8xf32>
    %145 = vector.shape_cast %144 : vector<8xf32> to vector<8x1xf32>
    %cst_53 = arith.constant 1.562500e-02 : f32
    %146 = vector.broadcast %cst_53 : f32 to vector<8x1xf32>
    %147 = arith.mulf %142, %146 : vector<8x1xf32>
    %cst_54 = arith.constant 1.562500e-02 : f32
    %148 = vector.broadcast %cst_54 : f32 to vector<8x1xf32>
    %149 = arith.mulf %145, %148 : vector<8x1xf32>
    %150 = arith.mulf %147, %147 : vector<8x1xf32>
    %151 = arith.subf %149, %150 : vector<8x1xf32>
    %cst_55 = arith.constant 0.000000e+00 : f32
    %152 = vector.broadcast %cst_55 : f32 to vector<8x1xf32>
    %153 = arith.maximumf %151, %152 : vector<8x1xf32>
    %154 = vector.broadcast %147 : vector<8x1xf32> to vector<8x64xf32>
    %155 = arith.subf %140, %154 : vector<8x64xf32>
    %cst_56 = arith.constant 9.99999974E-6 : f32
    %156 = vector.broadcast %cst_56 : f32 to vector<8x1xf32>
    %157 = arith.addf %153, %156 : vector<8x1xf32>
    %158 = math.rsqrt %157 : vector<8x1xf32>
    %159 = vector.broadcast %158 : vector<8x1xf32> to vector<8x64xf32>
    %160 = arith.mulf %155, %159 : vector<8x64xf32>
    %161 = vector.broadcast %8 : vector<1x64xf32> to vector<8x64xf32>
    %162 = arith.mulf %160, %161 : vector<8x64xf32>
    %163 = vector.broadcast %9 : vector<1x64xf32> to vector<8x64xf32>
    %164 = arith.addf %162, %163 : vector<8x64xf32>
    %cst_57 = arith.constant 0.333333343 : f32
    %165 = vector.broadcast %cst_57 : f32 to vector<8x64xf32>
    %166 = arith.mulf %165, %164 : vector<8x64xf32>
    %167 = arith.mulf %140, %19 : vector<8x64xf32>
    %cst_58 = arith.constant dense<0.000000e+00> : vector<8x384xf32>
    %168 = tpu.matmul %166, %15, %cst_58 {dimension_numbers = #tpu.dot_dimension_numbers<[1], [0], [0], [1], [0, 0, 1, 1], [], []>} : vector<8x64xf32>, vector<64x384xf32>, vector<8x384xf32> -> vector<8x384xf32>
    %cst_59 = arith.constant dense<0.000000e+00> : vector<8x384xf32>
    %169 = tpu.matmul %167, %16, %cst_59 {dimension_numbers = #tpu.dot_dimension_numbers<[1], [0], [0], [1], [0, 0, 1, 1], [], []>} : vector<8x64xf32>, vector<64x384xf32>, vector<8x384xf32> -> vector<8x384xf32>
    %170 = vector.extract_strided_slice %168 {offsets = [0, 0], sizes = [8, 64], strides = [1, 1]} : vector<8x384xf32> to vector<8x64xf32>
    %171 = vector.extract_strided_slice %169 {offsets = [0, 0], sizes = [8, 64], strides = [1, 1]} : vector<8x384xf32> to vector<8x64xf32>
    %172 = arith.addf %170, %171 : vector<8x64xf32>
    %173 = vector.broadcast %10 : vector<1x64xf32> to vector<8x64xf32>
    %174 = arith.addf %172, %173 : vector<8x64xf32>
    %175 = arith.negf %174 : vector<8x64xf32>
    %176 = math.exp %175 : vector<8x64xf32>
    %cst_60 = arith.constant 1.000000e+00 : f32
    %177 = vector.broadcast %cst_60 : f32 to vector<8x64xf32>
    %178 = arith.addf %177, %176 : vector<8x64xf32>
    %179 = arith.divf %177, %178 : vector<8x64xf32>
    %180 = vector.extract_strided_slice %168 {offsets = [0, 128], sizes = [8, 64], strides = [1, 1]} : vector<8x384xf32> to vector<8x64xf32>
    %181 = vector.extract_strided_slice %169 {offsets = [0, 128], sizes = [8, 64], strides = [1, 1]} : vector<8x384xf32> to vector<8x64xf32>
    %182 = arith.addf %180, %181 : vector<8x64xf32>
    %183 = vector.broadcast %11 : vector<1x64xf32> to vector<8x64xf32>
    %184 = arith.addf %182, %183 : vector<8x64xf32>
    %185 = arith.negf %184 : vector<8x64xf32>
    %186 = math.exp %185 : vector<8x64xf32>
    %cst_61 = arith.constant 1.000000e+00 : f32
    %187 = vector.broadcast %cst_61 : f32 to vector<8x64xf32>
    %188 = arith.addf %187, %186 : vector<8x64xf32>
    %189 = arith.divf %187, %188 : vector<8x64xf32>
    %190 = vector.extract_strided_slice %168 {offsets = [0, 256], sizes = [8, 64], strides = [1, 1]} : vector<8x384xf32> to vector<8x64xf32>
    %191 = vector.broadcast %12 : vector<1x64xf32> to vector<8x64xf32>
    %192 = arith.addf %190, %191 : vector<8x64xf32>
    %193 = vector.extract_strided_slice %169 {offsets = [0, 256], sizes = [8, 64], strides = [1, 1]} : vector<8x384xf32> to vector<8x64xf32>
    %194 = vector.broadcast %13 : vector<1x64xf32> to vector<8x64xf32>
    %195 = arith.addf %193, %194 : vector<8x64xf32>
    %196 = arith.mulf %179, %195 : vector<8x64xf32>
    %197 = arith.addf %192, %196 : vector<8x64xf32>
    %198 = math.tanh %197 : vector<8x64xf32>
    %cst_62 = arith.constant 1.000000e+00 : f32
    %199 = vector.broadcast %cst_62 : f32 to vector<8x64xf32>
    %200 = arith.subf %199, %189 : vector<8x64xf32>
    %201 = arith.mulf %200, %198 : vector<8x64xf32>
    %202 = arith.mulf %189, %167 : vector<8x64xf32>
    %203 = arith.addf %201, %202 : vector<8x64xf32>
    %cst_63 = arith.constant dense<0.000000e+00> : vector<8xf32>
    %204 = vector.multi_reduction <add>, %203, %cst_63 [1] : vector<8x64xf32> to vector<8xf32>
    %205 = vector.shape_cast %204 : vector<8xf32> to vector<8x1xf32>
    %206 = arith.mulf %203, %203 : vector<8x64xf32>
    %cst_64 = arith.constant dense<0.000000e+00> : vector<8xf32>
    %207 = vector.multi_reduction <add>, %206, %cst_64 [1] : vector<8x64xf32> to vector<8xf32>
    %208 = vector.shape_cast %207 : vector<8xf32> to vector<8x1xf32>
    %cst_65 = arith.constant 1.562500e-02 : f32
    %209 = vector.broadcast %cst_65 : f32 to vector<8x1xf32>
    %210 = arith.mulf %205, %209 : vector<8x1xf32>
    %cst_66 = arith.constant 1.562500e-02 : f32
    %211 = vector.broadcast %cst_66 : f32 to vector<8x1xf32>
    %212 = arith.mulf %208, %211 : vector<8x1xf32>
    %213 = arith.mulf %210, %210 : vector<8x1xf32>
    %214 = arith.subf %212, %213 : vector<8x1xf32>
    %cst_67 = arith.constant 0.000000e+00 : f32
    %215 = vector.broadcast %cst_67 : f32 to vector<8x1xf32>
    %216 = arith.maximumf %214, %215 : vector<8x1xf32>
    %217 = vector.broadcast %210 : vector<8x1xf32> to vector<8x64xf32>
    %218 = arith.subf %203, %217 : vector<8x64xf32>
    %cst_68 = arith.constant 9.99999974E-6 : f32
    %219 = vector.broadcast %cst_68 : f32 to vector<8x1xf32>
    %220 = arith.addf %216, %219 : vector<8x1xf32>
    %221 = math.rsqrt %220 : vector<8x1xf32>
    %222 = vector.broadcast %221 : vector<8x1xf32> to vector<8x64xf32>
    %223 = arith.mulf %218, %222 : vector<8x64xf32>
    %224 = vector.broadcast %8 : vector<1x64xf32> to vector<8x64xf32>
    %225 = arith.mulf %223, %224 : vector<8x64xf32>
    %226 = vector.broadcast %9 : vector<1x64xf32> to vector<8x64xf32>
    %227 = arith.addf %225, %226 : vector<8x64xf32>
    %cst_69 = arith.constant 0.666666686 : f32
    %228 = vector.broadcast %cst_69 : f32 to vector<8x64xf32>
    %229 = arith.mulf %228, %166 : vector<8x64xf32>
    %cst_70 = arith.constant 0.333333343 : f32
    %230 = vector.broadcast %cst_70 : f32 to vector<8x64xf32>
    %231 = arith.mulf %230, %227 : vector<8x64xf32>
    %232 = arith.addf %229, %231 : vector<8x64xf32>
    %233 = arith.mulf %203, %19 : vector<8x64xf32>
    %cst_71 = arith.constant dense<0.000000e+00> : vector<8x384xf32>
    %234 = tpu.matmul %232, %15, %cst_71 {dimension_numbers = #tpu.dot_dimension_numbers<[1], [0], [0], [1], [0, 0, 1, 1], [], []>} : vector<8x64xf32>, vector<64x384xf32>, vector<8x384xf32> -> vector<8x384xf32>
    %cst_72 = arith.constant dense<0.000000e+00> : vector<8x384xf32>
    %235 = tpu.matmul %233, %16, %cst_72 {dimension_numbers = #tpu.dot_dimension_numbers<[1], [0], [0], [1], [0, 0, 1, 1], [], []>} : vector<8x64xf32>, vector<64x384xf32>, vector<8x384xf32> -> vector<8x384xf32>
    %236 = vector.extract_strided_slice %234 {offsets = [0, 0], sizes = [8, 64], strides = [1, 1]} : vector<8x384xf32> to vector<8x64xf32>
    %237 = vector.extract_strided_slice %235 {offsets = [0, 0], sizes = [8, 64], strides = [1, 1]} : vector<8x384xf32> to vector<8x64xf32>
    %238 = arith.addf %236, %237 : vector<8x64xf32>
    %239 = vector.broadcast %10 : vector<1x64xf32> to vector<8x64xf32>
    %240 = arith.addf %238, %239 : vector<8x64xf32>
    %241 = arith.negf %240 : vector<8x64xf32>
    %242 = math.exp %241 : vector<8x64xf32>
    %cst_73 = arith.constant 1.000000e+00 : f32
    %243 = vector.broadcast %cst_73 : f32 to vector<8x64xf32>
    %244 = arith.addf %243, %242 : vector<8x64xf32>
    %245 = arith.divf %243, %244 : vector<8x64xf32>
    %246 = vector.extract_strided_slice %234 {offsets = [0, 128], sizes = [8, 64], strides = [1, 1]} : vector<8x384xf32> to vector<8x64xf32>
    %247 = vector.extract_strided_slice %235 {offsets = [0, 128], sizes = [8, 64], strides = [1, 1]} : vector<8x384xf32> to vector<8x64xf32>
    %248 = arith.addf %246, %247 : vector<8x64xf32>
    %249 = vector.broadcast %11 : vector<1x64xf32> to vector<8x64xf32>
    %250 = arith.addf %248, %249 : vector<8x64xf32>
    %251 = arith.negf %250 : vector<8x64xf32>
    %252 = math.exp %251 : vector<8x64xf32>
    %cst_74 = arith.constant 1.000000e+00 : f32
    %253 = vector.broadcast %cst_74 : f32 to vector<8x64xf32>
    %254 = arith.addf %253, %252 : vector<8x64xf32>
    %255 = arith.divf %253, %254 : vector<8x64xf32>
    %256 = vector.extract_strided_slice %234 {offsets = [0, 256], sizes = [8, 64], strides = [1, 1]} : vector<8x384xf32> to vector<8x64xf32>
    %257 = vector.broadcast %12 : vector<1x64xf32> to vector<8x64xf32>
    %258 = arith.addf %256, %257 : vector<8x64xf32>
    %259 = vector.extract_strided_slice %235 {offsets = [0, 256], sizes = [8, 64], strides = [1, 1]} : vector<8x384xf32> to vector<8x64xf32>
    %260 = vector.broadcast %13 : vector<1x64xf32> to vector<8x64xf32>
    %261 = arith.addf %259, %260 : vector<8x64xf32>
    %262 = arith.mulf %245, %261 : vector<8x64xf32>
    %263 = arith.addf %258, %262 : vector<8x64xf32>
    %264 = math.tanh %263 : vector<8x64xf32>
    %cst_75 = arith.constant 1.000000e+00 : f32
    %265 = vector.broadcast %cst_75 : f32 to vector<8x64xf32>
    %266 = arith.subf %265, %255 : vector<8x64xf32>
    %267 = arith.mulf %266, %264 : vector<8x64xf32>
    %268 = arith.mulf %255, %233 : vector<8x64xf32>
    %269 = arith.addf %267, %268 : vector<8x64xf32>
    %cst_76 = arith.constant dense<0.000000e+00> : vector<8xf32>
    %270 = vector.multi_reduction <add>, %269, %cst_76 [1] : vector<8x64xf32> to vector<8xf32>
    %271 = vector.shape_cast %270 : vector<8xf32> to vector<8x1xf32>
    %272 = arith.mulf %269, %269 : vector<8x64xf32>
    %cst_77 = arith.constant dense<0.000000e+00> : vector<8xf32>
    %273 = vector.multi_reduction <add>, %272, %cst_77 [1] : vector<8x64xf32> to vector<8xf32>
    %274 = vector.shape_cast %273 : vector<8xf32> to vector<8x1xf32>
    %cst_78 = arith.constant 1.562500e-02 : f32
    %275 = vector.broadcast %cst_78 : f32 to vector<8x1xf32>
    %276 = arith.mulf %271, %275 : vector<8x1xf32>
    %cst_79 = arith.constant 1.562500e-02 : f32
    %277 = vector.broadcast %cst_79 : f32 to vector<8x1xf32>
    %278 = arith.mulf %274, %277 : vector<8x1xf32>
    %279 = arith.mulf %276, %276 : vector<8x1xf32>
    %280 = arith.subf %278, %279 : vector<8x1xf32>
    %cst_80 = arith.constant 0.000000e+00 : f32
    %281 = vector.broadcast %cst_80 : f32 to vector<8x1xf32>
    %282 = arith.maximumf %280, %281 : vector<8x1xf32>
    %283 = vector.broadcast %276 : vector<8x1xf32> to vector<8x64xf32>
    %284 = arith.subf %269, %283 : vector<8x64xf32>
    %cst_81 = arith.constant 9.99999974E-6 : f32
    %285 = vector.broadcast %cst_81 : f32 to vector<8x1xf32>
    %286 = arith.addf %282, %285 : vector<8x1xf32>
    %287 = math.rsqrt %286 : vector<8x1xf32>
    %288 = vector.broadcast %287 : vector<8x1xf32> to vector<8x64xf32>
    %289 = arith.mulf %284, %288 : vector<8x64xf32>
    %290 = vector.broadcast %8 : vector<1x64xf32> to vector<8x64xf32>
    %291 = arith.mulf %289, %290 : vector<8x64xf32>
    %292 = vector.broadcast %9 : vector<1x64xf32> to vector<8x64xf32>
    %293 = arith.addf %291, %292 : vector<8x64xf32>
    %cst_82 = arith.constant 0.666666686 : f32
    %294 = vector.broadcast %cst_82 : f32 to vector<8x64xf32>
    %295 = arith.mulf %294, %232 : vector<8x64xf32>
    %cst_83 = arith.constant 0.333333343 : f32
    %296 = vector.broadcast %cst_83 : f32 to vector<8x64xf32>
    %297 = arith.mulf %296, %293 : vector<8x64xf32>
    %298 = arith.addf %295, %297 : vector<8x64xf32>
    %c0_84 = arith.constant 0 : index
    %c384 = arith.constant 384 : index
    %299 = vector.load %arg2[%c0_84, %c384] : memref<128x576xf32, #tpu.memory_space<vmem>>, vector<64x128xf32>
    %cst_85 = arith.constant dense<0.000000e+00> : vector<8x128xf32>
    %300 = tpu.matmul %298, %299, %cst_85 {dimension_numbers = #tpu.dot_dimension_numbers<[1], [0], [0], [1], [0, 0, 1, 1], [], []>} : vector<8x64xf32>, vector<64x128xf32>, vector<8x128xf32> -> vector<8x128xf32>
    %c64_86 = arith.constant 64 : index
    %c384_87 = arith.constant 384 : index
    %301 = vector.load %arg2[%c64_86, %c384_87] : memref<128x576xf32, #tpu.memory_space<vmem>>, vector<64x128xf32>
    %cst_88 = arith.constant dense<0.000000e+00> : vector<8x128xf32>
    %302 = tpu.matmul %269, %301, %cst_88 {dimension_numbers = #tpu.dot_dimension_numbers<[1], [0], [0], [1], [0, 0, 1, 1], [], []>} : vector<8x64xf32>, vector<64x128xf32>, vector<8x128xf32> -> vector<8x128xf32>
    %303 = arith.addf %300, %302 : vector<8x128xf32>
    %304 = vector.broadcast %14 : vector<1x128xf32> to vector<8x128xf32>
    %305 = arith.addf %303, %304 : vector<8x128xf32>
    %c0_89 = arith.constant 0 : index
    %c0_90 = arith.constant 0 : index
    %306 = vector.load %arg3[%c0_89, %c0_90] : memref<8x128xf32, #tpu.memory_space<vmem>>, vector<8x128xf32>
    tpu.vector_store %arg3[%c0_89, %c0_90], %305 {strides = array<i32>} : memref<8x128xf32, #tpu.memory_space<vmem>>, vector<8x128xf32>,
    return
  }
}

</mosaic_0001>

<llo_original>
// kernel: r_critic_meta_forward.1
$region0: #{r_critic_meta_forward.1}
  #allocation0 [shape = 'u32[]', space=smem, size = 0x4, offset = 0x4, fixed_abs, tag = 'smem constant byte address 0x4 - core index']
  #allocation1 [shape = 'u32[144,128]{1,0:T(1,128)}', space=vmem, size = 0x12000, scoped, tag = 'internal scratch']
  %s0 = inlined_call_operand.vmem [shape: f32[8,384], index: 0, kind: input, shape index: {}]
  %s1 = inlined_call_operand.vmem [shape: f32[16,128], index: 1, kind: input, shape index: {}]
  %s2 = inlined_call_operand.vmem [shape: f32[128,576], index: 2, kind: input, shape index: {}]
  %s3 = inlined_call_operand.vmem [shape: f32[8,128], index: 3, kind: output, shape index: {}]
  %s4 = sld [smem:[#allocation0]]
  $region22: #{r_critic_meta_forward.1} parent=0
    _
  %s6 = ssub.s32 1, %s4
  %s7 = scalar_select 0, %s6, %s4
  // Predicated region
  $region2: #{r_critic_meta_forward.1} parent=0 // pred_check
    _
  $region3: #{r_critic_meta_forward.1} parent=0 // pred_check_branch
    %9 = sbr.rel (0) target = $region5
  $region4: #{r_critic_meta_forward.1} parent=0 // pred_region
    _
  $region5: #{r_critic_meta_forward.1} parent=0 // pred_fallthru
    _
  // Predicated region
  $region6: #{r_critic_meta_forward.1} parent=0 // pred_check
    _
  $region7: #{r_critic_meta_forward.1} parent=0 // pred_check_branch
    %11 = sbr.rel (0) target = $region9
  $region8: #{r_critic_meta_forward.1} parent=0 // pred_region
    _
  $region9: #{r_critic_meta_forward.1} parent=0 // pred_fallthru
    _
  // Predicated region
  $region10: #{r_critic_meta_forward.1} parent=0 // pred_check
    _
  $region11: #{r_critic_meta_forward.1} parent=0 // pred_check_branch
    %13 = sbr.rel (0) target = $region13
  $region12: #{r_critic_meta_forward.1} parent=0 // pred_region
    _
  $region13: #{r_critic_meta_forward.1} parent=0 // pred_fallthru
    _
  %v14 = vld [vmem:[%s1] sm:$0x1]
  %v15 = vld [vmem:[%s1 + $0x1] sm:$0x1]
  %v16 = vld [vmem:[%s1 + $0x2] sm:$0x1]
  %v17 = vld [vmem:[%s1 + $0x3] sm:$0x1]
  %v18 = vld [vmem:[%s1 + $0x4] sm:$0x1]
  %v19 = vld [vmem:[%s1 + $0x5] sm:$0x1]
  %v20 = vld [vmem:[%s1 + $0x6] sm:$0x1]
  %v21 = vld [vmem:[%s1 + $0x7] sm:$0x1]
  %v22 = vld [vmem:[%s1 + $0x8] sm:$0x1]
  %v23 = vld [vmem:[%s1 + $0x9] sm:$0x1]
  %v24 = vld [vmem:[%s1 + $0xa] sm:$0x1]
  %v25 = vld [vmem:[%s1 + $0xb] sm:$0x1]
  %v26 = vld [vmem:[%s1 + $0xc] sm:$0x1]
  %v27 = vld [vmem:[%s1 + $0xd] sm:$0x1]
  %v28 = vld [vmem:[%s1 + $0xe] sm:$0x1]
  %v29 = vld [vmem:[%s2] sm:$0xff]
  %v30 = vld [vmem:[%s2 + $0x8] sm:$0xff]
  %v31 = vld [vmem:[%s2 + $0x10] sm:$0xff]
  %v32 = vld [vmem:[%s2 + $0x28] sm:$0xff]
  %v33 = vld [vmem:[%s2 + $0x30] sm:$0xff]
  %v34 = vld [vmem:[%s2 + $0x38] sm:$0xff]
  %v35 = vld [vmem:[%s2 + $0x50] sm:$0xff]
  %v36 = vld [vmem:[%s2 + $0x58] sm:$0xff]
  %v37 = vld [vmem:[%s2 + $0x60] sm:$0xff]
  %v38 = vld [vmem:[%s2 + $0x78] sm:$0xff]
  %v39 = vld [vmem:[%s2 + $0x80] sm:$0xff]
  %v40 = vld [vmem:[%s2 + $0x88] sm:$0xff]
  %v41 = vld [vmem:[%s2 + $0xa0] sm:$0xff]
  %v42 = vld [vmem:[%s2 + $0xa8] sm:$0xff]
  %v43 = vld [vmem:[%s2 + $0xb0] sm:$0xff]
  %v44 = vld [vmem:[%s2 + $0xc8] sm:$0xff]
  %v45 = vld [vmem:[%s2 + $0xd0] sm:$0xff]
  %v46 = vld [vmem:[%s2 + $0xd8] sm:$0xff]
  %v47 = vld [vmem:[%s2 + $0xf0] sm:$0xff]
  %v48 = vld [vmem:[%s2 + $0xf8] sm:$0xff]
  %v49 = vld [vmem:[%s2 + $0x100] sm:$0xff]
  %v50 = vld [vmem:[%s2 + $0x118] sm:$0xff]
  %v51 = vld [vmem:[%s2 + $0x120] sm:$0xff]
  %v52 = vld [vmem:[%s2 + $0x128] sm:$0xff]
  %v53 = vld [vmem:[%s2 + $0x140] sm:$0xff]
  %v54 = vld [vmem:[%s2 + $0x148] sm:$0xff]
  %v55 = vld [vmem:[%s2 + $0x150] sm:$0xff]
  %v56 = vld [vmem:[%s2 + $0x168] sm:$0xff]
  %v57 = vld [vmem:[%s2 + $0x170] sm:$0xff]
  %v58 = vld [vmem:[%s2 + $0x178] sm:$0xff]
  %v59 = vld [vmem:[%s2 + $0x190] sm:$0xff]
  %v60 = vld [vmem:[%s2 + $0x198] sm:$0xff]
  %v61 = vld [vmem:[%s2 + $0x1a0] sm:$0xff]
  %v62 = vld [vmem:[%s2 + $0x1b8] sm:$0xff]
  %v63 = vld [vmem:[%s2 + $0x1c0] sm:$0xff]
  %v64 = vld [vmem:[%s2 + $0x1c8] sm:$0xff]
  %v65 = vld [vmem:[%s2 + $0x1e0] sm:$0xff]
  %v66 = vld [vmem:[%s2 + $0x1e8] sm:$0xff]
  %v67 = vld [vmem:[%s2 + $0x1f0] sm:$0xff]
  %v68 = vld [vmem:[%s2 + $0x208] sm:$0xff]
  %v69 = vld [vmem:[%s2 + $0x210] sm:$0xff]
  %v70 = vld [vmem:[%s2 + $0x218] sm:$0xff]
  %v71 = vld [vmem:[%s2 + $0x230] sm:$0xff]
  %v72 = vld [vmem:[%s2 + $0x238] sm:$0xff]
  %v73 = vld [vmem:[%s2 + $0x240] sm:$0xff]
  %v74 = vld [vmem:[%s2 + $0x258] sm:$0xff]
  %v75 = vld [vmem:[%s2 + $0x260] sm:$0xff]
  %v76 = vld [vmem:[%s2 + $0x268] sm:$0xff]
  %v77 = vld [vmem:[%s0] sm:$0xff]
  %v78 = vld [vmem:[%s0 + $0x8] sm:$0xff]
  %v79 = vld [vmem:[%s0 + $0x10] sm:$0xff]
  %vm80 = vcmask 261120
  %v81 = vsel %vm80, %v77, 0.0
  %82 = vadd.xlane.f32.xlu0 %v81
  %v83 = vpop.xlane.xlu0 %82
  %v84 = vmul.f32 %v77, %v77
  %v85 = vsel %vm80, %v84, 0.0
  %86 = vadd.xlane.f32.xlu0 %v85
  %v87 = vpop.xlane.xlu0 %86
  %v88 = vmul.f32 %v83, 0.03125
  %v89 = vmul.f32 %v87, 0.03125
  %v90 = vmul.f32 %v88, %v88
  %v91 = vsub.f32 %v89, %v90
  %v92 = vmax.f32 %v91, 0.0
  %v93 = vsub.f32 %v77, %v88
  %v94 = vadd.f32 %v92, 1e-05
  %v95 = vrsqrt.pop %v94
  %v96 = vmul.f32 %v93, %v95
  %v97 = vlaneseq
  %v98 = vshrl.u32 %v97, 7
  %v99 = vsub.s32 0, %v98
  %v100 = vrot.slane %v14, %v99
  %v101 = vmul.f32 %v96, %v100
  %v102 = vlaneseq
  %v103 = vshrl.u32 %v102, 7
  %v104 = vsub.s32 0, %v103
  %v105 = vrot.slane %v15, %v104
  %v106 = vadd.f32 %v101, %v105
  %v107 = vld [vmem:[%s2 + $0x20] sm:$0xff]
  %v108 = vld [vmem:[%s2 + $0x48] sm:$0xff]
  %v109 = vld [vmem:[%s2 + $0x70] sm:$0xff]
  %v110 = vld [vmem:[%s2 + $0x98] sm:$0xff]
  %v111 = vlaneseq
  %v112 = vshrl.u32 %v111, 7
  %v113 = vsub.s32 0, %v112
  %v114 = vrot.slane %v16, %v113
  %v116 = vsel %vm80, %v106, 0
  %118 = vmatprep.subr.mxu0 0.0
  %119 = vmatpush1.msra.mxu0 0.0
  %120 = vmatprep.subr.mxu0 0.0
  %121 = vmatpush1.msra.mxu0 0.0
  %122 = vmatprep.subr.mxu0 0.0
  %123 = vmatpush1.msra.mxu0 0.0
  %124 = vmatprep.subr.mxu0 0.0
  %125 = vmatpush1.msra.mxu0 0.0
  %126 = vmatprep.subr.mxu0 0.0
  %127 = vmatpush1.msra.mxu0 0.0
  %128 = vmatprep.subr.mxu0 0.0
  %129 = vmatpush1.msra.mxu0 0.0
  %130 = vmatprep.subr.mxu0 0.0
  %131 = vmatpush1.msra.mxu0 0.0
  %132 = vmatprep.subr.mxu0 0.0
  %133 = vmatpush1.msra.mxu0 0.0
  %134 = vmatprep.subr.mxu0 0.0
  %135 = vmatpush1.msra.mxu0 0.0
  %136 = vmatprep.subr.mxu0 0.0
  %137 = vmatpush1.msra.mxu0 0.0
  %138 = vmatprep.subr.mxu0 0.0
  %139 = vmatpush1.msra.mxu0 0.0
  %140 = vmatprep.subr.mxu0 0.0
  %141 = vmatpush1.msra.mxu0 0.0
  %142 = vmatprep.subr.mxu0 0.0
  %143 = vmatpush1.msra.mxu0 %v110
  %144 = vmatprep.subr.mxu0 0.0
  %145 = vmatpush1.msra.mxu0 %v109
  %146 = vmatprep.subr.mxu0 0.0
  %147 = vmatpush1.msra.mxu0 %v108
  %148 = vmatprep.subr.mxu0 0.0
  %149 = vmatpush1.msra.mxu0 %v107
  %150 = vmatprep.subr.mxu0 0.0
  %151 = vmatpush2.msra.mxu0 0.0
  %152 = vmatprep.subr.mxu0 0.0
  %153 = vmatpush2.msra.mxu0 0.0
  %154 = vmatprep.subr.mxu0 0.0
  %155 = vmatpush2.msra.mxu0 0.0
  %156 = vmatprep.subr.mxu0 0.0
  %157 = vmatpush2.msra.mxu0 0.0
  %158 = vmatprep.subr.mxu0 0.0
  %159 = vmatpush2.msra.mxu0 0.0
  %160 = vmatprep.subr.mxu0 0.0
  %161 = vmatpush2.msra.mxu0 0.0
  %162 = vmatprep.subr.mxu0 0.0
  %163 = vmatpush2.msra.mxu0 0.0
  %164 = vmatprep.subr.mxu0 0.0
  %165 = vmatpush2.msra.mxu0 0.0
  %166 = vmatprep.subr.mxu0 0.0
  %167 = vmatpush2.msra.mxu0 0.0
  %168 = vmatprep.subr.mxu0 0.0
  %169 = vmatpush2.msra.mxu0 0.0
  %170 = vmatprep.subr.mxu0 0.0
  %171 = vmatpush2.msra.mxu0 0.0
  %172 = vmatprep.subr.mxu0 0.0
  %173 = vmatpush2.msra.mxu0 0.0
  %174 = vmatprep.subr.mxu0 0.0
  %175 = vmatpush2.msra.mxu0 0.0
  %176 = vmatprep.subr.mxu0 0.0
  %177 = vmatpush2.msra.mxu0 0.0
  %178 = vmatprep.subr.mxu0 0.0
  %179 = vmatpush2.msra.mxu0 0.0
  %180 = vmatprep.subr.mxu0 0.0
  %181 = vmatpush2.msra.mxu0 0.0
  %182 = vmatprep.mubr.f32.mxu0 0.0
  %183 = vmatmul.mubr.f32.gmra.mxu0 %v116
  %v184 = vpop.f32.mrf.mxu0
  %v185 = vadd.f32 %v114, %v184
  %v186 = vpop.f32.mrf.mxu0
  %187 = vdwg.mxu0
  %v188 = vmax.f32 %v185, 0.0
  %vm189 = vcmask 523264
  %v190 = vsel %vm189, %v188, 0.0
  %191 = vadd.xlane.f32.xlu0 %v190
  %v192 = vpop.xlane.xlu0 %191
  %v193 = vmul.f32 %v188, %v188
  %v194 = vsel %vm189, %v193, 0.0
  %195 = vadd.xlane.f32.xlu0 %v194
  %v196 = vpop.xlane.xlu0 %195
  %v197 = vmul.f32 %v192, 0.015625
  %v198 = vmul.f32 %v196, 0.015625
  %v199 = vmul.f32 %v197, %v197
  %v200 = vsub.f32 %v198, %v199
  %v201 = vmax.f32 %v200, 0.0
  %v202 = vsub.f32 %v188, %v197
  %v203 = vadd.f32 %v201, 1e-05
  %v204 = vrsqrt.pop %v203
  %v205 = vmul.f32 %v202, %v204
  %v206 = vlaneseq
  %v207 = vshrl.u32 %v206, 7
  %v208 = vsub.s32 0, %v207
  %v209 = vrot.slane %v17, %v208
  %v210 = vmul.f32 %v205, %v209
  %v211 = vlaneseq
  %v212 = vshrl.u32 %v211, 7
  %v213 = vsub.s32 0, %v212
  %v214 = vrot.slane %v18, %v213
  %v215 = vadd.f32 %v210, %v214
  %v216 = vld [vmem:[%s2 + $0x160] sm:$0xff]
  %v217 = vld [vmem:[%s2 + $0x188] sm:$0xff]
  %v218 = vld [vmem:[%s2 + $0x1b0] sm:$0xff]
  %v219 = vld [vmem:[%s2 + $0x1d8] sm:$0xff]
  %v220 = vld [vmem:[%s2 + $0x200] sm:$0xff]
  %v221 = vld [vmem:[%s2 + $0x228] sm:$0xff]
  %v222 = vld [vmem:[%s2 + $0x250] sm:$0xff]
  %v223 = vld [vmem:[%s2 + $0x278] sm:$0xff]
  %v224 = vlaneseq
  %v225 = vshrl.u32 %v224, 7
  %v226 = vsub.s32 0, %v225
  %v227 = vrot.slane %v19, %v226
  %v229 = vsel %vm189, %v215, 0
  %231 = vmatprep.subr.mxu0 0.0
  %232 = vmatpush1.msra.mxu0 0.0
  %233 = vmatprep.subr.mxu0 0.0
  %234 = vmatpush1.msra.mxu0 0.0
  %235 = vmatprep.subr.mxu0 0.0
  %236 = vmatpush1.msra.mxu0 0.0
  %237 = vmatprep.subr.mxu0 0.0
  %238 = vmatpush1.msra.mxu0 0.0
  %239 = vmatprep.subr.mxu0 0.0
  %240 = vmatpush1.msra.mxu0 0.0
  %241 = vmatprep.subr.mxu0 0.0
  %242 = vmatpush1.msra.mxu0 0.0
  %243 = vmatprep.subr.mxu0 0.0
  %244 = vmatpush1.msra.mxu0 0.0
  %245 = vmatprep.subr.mxu0 0.0
  %246 = vmatpush1.msra.mxu0 0.0
  %247 = vmatprep.subr.mxu0 0.0
  %248 = vmatpush1.msra.mxu0 %v223
  %249 = vmatprep.subr.mxu0 0.0
  %250 = vmatpush1.msra.mxu0 %v222
  %251 = vmatprep.subr.mxu0 0.0
  %252 = vmatpush1.msra.mxu0 %v221
  %253 = vmatprep.subr.mxu0 0.0
  %254 = vmatpush1.msra.mxu0 %v220
  %255 = vmatprep.subr.mxu0 0.0
  %256 = vmatpush1.msra.mxu0 %v219
  %257 = vmatprep.subr.mxu0 0.0
  %258 = vmatpush1.msra.mxu0 %v218
  %259 = vmatprep.subr.mxu0 0.0
  %260 = vmatpush1.msra.mxu0 %v217
  %261 = vmatprep.subr.mxu0 0.0
  %262 = vmatpush1.msra.mxu0 %v216
  %263 = vmatprep.subr.mxu0 0.0
  %264 = vmatpush2.msra.mxu0 0.0
  %265 = vmatprep.subr.mxu0 0.0
  %266 = vmatpush2.msra.mxu0 0.0
  %267 = vmatprep.subr.mxu0 0.0
  %268 = vmatpush2.msra.mxu0 0.0
  %269 = vmatprep.subr.mxu0 0.0
  %270 = vmatpush2.msra.mxu0 0.0
  %271 = vmatprep.subr.mxu0 0.0
  %272 = vmatpush2.msra.mxu0 0.0
  %273 = vmatprep.subr.mxu0 0.0
  %274 = vmatpush2.msra.mxu0 0.0
  %275 = vmatprep.subr.mxu0 0.0
  %276 = vmatpush2.msra.mxu0 0.0
  %277 = vmatprep.subr.mxu0 0.0
  %278 = vmatpush2.msra.mxu0 0.0
  %279 = vmatprep.subr.mxu0 0.0
  %280 = vmatpush2.msra.mxu0 0.0
  %281 = vmatprep.subr.mxu0 0.0
  %282 = vmatpush2.msra.mxu0 0.0
  %283 = vmatprep.subr.mxu0 0.0
  %284 = vmatpush2.msra.mxu0 0.0
  %285 = vmatprep.subr.mxu0 0.0
  %286 = vmatpush2.msra.mxu0 0.0
  %287 = vmatprep.subr.mxu0 0.0
  %288 = vmatpush2.msra.mxu0 0.0
  %289 = vmatprep.subr.mxu0 0.0
  %290 = vmatpush2.msra.mxu0 0.0
  %291 = vmatprep.subr.mxu0 0.0
  %292 = vmatpush2.msra.mxu0 0.0
  %293 = vmatprep.subr.mxu0 0.0
  %294 = vmatpush2.msra.mxu0 0.0
  %295 = vmatprep.mubr.f32.mxu0 0.0
  %296 = vmatmul.mubr.f32.gmra.mxu0 %v229
  %v297 = vpop.f32.mrf.mxu0
  %v298 = vadd.f32 %v227, %v297
  %v299 = vpop.f32.mrf.mxu0
  %300 = vdwg.mxu0
  %v301 = vmax.f32 %v298, 0.0
  %v302 = vsel %vm189, %v301, 0.0
  %303 = vadd.xlane.f32.xlu0 %v302
  %v304 = vpop.xlane.xlu0 %303
  %v305 = vmul.f32 %v301, %v301
  %v306 = vsel %vm189, %v305, 0.0
  %307 = vadd.xlane.f32.xlu0 %v306
  %v308 = vpop.xlane.xlu0 %307
  %v309 = vmul.f32 %v304, 0.015625
  %v310 = vmul.f32 %v308, 0.015625
  %v311 = vmul.f32 %v309, %v309
  %v312 = vsub.f32 %v310, %v311
  %v313 = vmax.f32 %v312, 0.0
  %v314 = vsub.f32 %v301, %v309
  %v315 = vadd.f32 %v313, 1e-05
  %v316 = vrsqrt.pop %v315
  %v317 = vmul.f32 %v314, %v316
  %v318 = vlaneseq
  %v319 = vshrl.u32 %v318, 7
  %v320 = vsub.s32 0, %v319
  %v321 = vrot.slane %v20, %v320
  %v322 = vmul.f32 %v317, %v321
  %v323 = vlaneseq
  %v324 = vshrl.u32 %v323, 7
  %v325 = vsub.s32 0, %v324
  %v326 = vrot.slane %v21, %v325
  %v327 = vadd.f32 %v322, %v326
  %v328 = vmul.f32 %v78, %v79
  %v330 = vsel %vm189, %v327, 0
  %332 = vmatprep.subr.mxu0 0.0
  %333 = vmatpush1.msra.mxu0 0.0
  %334 = vmatprep.subr.mxu0 0.0
  %335 = vmatpush1.msra.mxu0 0.0
  %336 = vmatprep.subr.mxu0 0.0
  %337 = vmatpush1.msra.mxu0 0.0
  %338 = vmatprep.subr.mxu0 0.0
  %339 = vmatpush1.msra.mxu0 0.0
  %340 = vmatprep.subr.mxu0 0.0
  %341 = vmatpush1.msra.mxu0 0.0
  %342 = vmatprep.subr.mxu0 0.0
  %343 = vmatpush1.msra.mxu0 0.0
  %344 = vmatprep.subr.mxu0 0.0
  %345 = vmatpush1.msra.mxu0 0.0
  %346 = vmatprep.subr.mxu0 0.0
  %347 = vmatpush1.msra.mxu0 0.0
  %348 = vmatprep.subr.mxu0 %v51
  %349 = vmatpush1.msra.mxu0 %v50
  %350 = vmatprep.subr.mxu0 %v48
  %351 = vmatpush1.msra.mxu0 %v47
  %352 = vmatprep.subr.mxu0 %v45
  %353 = vmatpush1.msra.mxu0 %v44
  %354 = vmatprep.subr.mxu0 %v42
  %355 = vmatpush1.msra.mxu0 %v41
  %356 = vmatprep.subr.mxu0 %v39
  %357 = vmatpush1.msra.mxu0 %v38
  %358 = vmatprep.subr.mxu0 %v36
  %359 = vmatpush1.msra.mxu0 %v35
  %360 = vmatprep.subr.mxu0 %v33
  %361 = vmatpush1.msra.mxu0 %v32
  %362 = vmatprep.subr.mxu0 %v30
  %363 = vmatpush1.msra.mxu0 %v29
  %364 = vmatprep.subr.mxu0 0.0
  %365 = vmatpush2.msra.mxu0 0.0
  %366 = vmatprep.subr.mxu0 0.0
  %367 = vmatpush2.msra.mxu0 0.0
  %368 = vmatprep.subr.mxu0 0.0
  %369 = vmatpush2.msra.mxu0 0.0
  %370 = vmatprep.subr.mxu0 0.0
  %371 = vmatpush2.msra.mxu0 0.0
  %372 = vmatprep.subr.mxu0 0.0
  %373 = vmatpush2.msra.mxu0 0.0
  %374 = vmatprep.subr.mxu0 0.0
  %375 = vmatpush2.msra.mxu0 0.0
  %376 = vmatprep.subr.mxu0 0.0
  %377 = vmatpush2.msra.mxu0 0.0
  %378 = vmatprep.subr.mxu0 0.0
  %379 = vmatpush2.msra.mxu0 0.0
  %380 = vmatprep.subr.mxu0 0.0
  %381 = vmatpush2.msra.mxu0 0.0
  %382 = vmatprep.subr.mxu0 0.0
  %383 = vmatpush2.msra.mxu0 0.0
  %384 = vmatprep.subr.mxu0 0.0
  %385 = vmatpush2.msra.mxu0 0.0
  %386 = vmatprep.subr.mxu0 0.0
  %387 = vmatpush2.msra.mxu0 0.0
  %388 = vmatprep.subr.mxu0 0.0
  %389 = vmatpush2.msra.mxu0 0.0
  %390 = vmatprep.subr.mxu0 0.0
  %391 = vmatpush2.msra.mxu0 0.0
  %392 = vmatprep.subr.mxu0 0.0
  %393 = vmatpush2.msra.mxu0 0.0
  %394 = vmatprep.subr.mxu0 0.0
  %395 = vmatpush2.msra.mxu0 0.0
  %396 = vmatprep.mubr.f32.mxu0 0.0
  %397 = vmatmul.mubr.f32.gmra.mxu0 %v330
  %v398 = vpop.f32.mrf.mxu0
  %v399 = vadd.f32 0.0, %v398
  %v400 = vpop.f32.mrf.mxu0
  %v401 = vadd.f32 0.0, %v400
  %402 = vdwg.mxu0
  %403 = vmatprep.subr.mxu0 0.0
  %404 = vmatpush1.msra.mxu0 0.0
  %405 = vmatprep.subr.mxu0 0.0
  %406 = vmatpush1.msra.mxu0 0.0
  %407 = vmatprep.subr.mxu0 0.0
  %408 = vmatpush1.msra.mxu0 0.0
  %409 = vmatprep.subr.mxu0 0.0
  %410 = vmatpush1.msra.mxu0 0.0
  %411 = vmatprep.subr.mxu0 0.0
  %412 = vmatpush1.msra.mxu0 0.0
  %413 = vmatprep.subr.mxu0 0.0
  %414 = vmatpush1.msra.mxu0 0.0
  %415 = vmatprep.subr.mxu0 0.0
  %416 = vmatpush1.msra.mxu0 0.0
  %417 = vmatprep.subr.mxu0 0.0
  %418 = vmatpush1.msra.mxu0 0.0
  %419 = vmatprep.subr.mxu0 0.0
  %420 = vmatpush1.msra.mxu0 %v52
  %421 = vmatprep.subr.mxu0 0.0
  %422 = vmatpush1.msra.mxu0 %v49
  %423 = vmatprep.subr.mxu0 0.0
  %424 = vmatpush1.msra.mxu0 %v46
  %425 = vmatprep.subr.mxu0 0.0
  %426 = vmatpush1.msra.mxu0 %v43
  %427 = vmatprep.subr.mxu0 0.0
  %428 = vmatpush1.msra.mxu0 %v40
  %429 = vmatprep.subr.mxu0 0.0
  %430 = vmatpush1.msra.mxu0 %v37
  %431 = vmatprep.subr.mxu0 0.0
  %432 = vmatpush1.msra.mxu0 %v34
  %433 = vmatprep.subr.mxu0 0.0
  %434 = vmatpush1.msra.mxu0 %v31
  %435 = vmatprep.subr.mxu0 0.0
  %436 = vmatpush2.msra.mxu0 0.0
  %437 = vmatprep.subr.mxu0 0.0
  %438 = vmatpush2.msra.mxu0 0.0
  %439 = vmatprep.subr.mxu0 0.0
  %440 = vmatpush2.msra.mxu0 0.0
  %441 = vmatprep.subr.mxu0 0.0
  %442 = vmatpush2.msra.mxu0 0.0
  %443 = vmatprep.subr.mxu0 0.0
  %444 = vmatpush2.msra.mxu0 0.0
  %445 = vmatprep.subr.mxu0 0.0
  %446 = vmatpush2.msra.mxu0 0.0
  %447 = vmatprep.subr.mxu0 0.0
  %448 = vmatpush2.msra.mxu0 0.0
  %449 = vmatprep.subr.mxu0 0.0
  %450 = vmatpush2.msra.mxu0 0.0
  %451 = vmatprep.subr.mxu0 0.0
  %452 = vmatpush2.msra.mxu0 0.0
  %453 = vmatprep.subr.mxu0 0.0
  %454 = vmatpush2.msra.mxu0 0.0
  %455 = vmatprep.subr.mxu0 0.0
  %456 = vmatpush2.msra.mxu0 0.0
  %457 = vmatprep.subr.mxu0 0.0
  %458 = vmatpush2.msra.mxu0 0.0
  %459 = vmatprep.subr.mxu0 0.0
  %460 = vmatpush2.msra.mxu0 0.0
  %461 = vmatprep.subr.mxu0 0.0
  %462 = vmatpush2.msra.mxu0 0.0
  %463 = vmatprep.subr.mxu0 0.0
  %464 = vmatpush2.msra.mxu0 0.0
  %465 = vmatprep.subr.mxu0 0.0
  %466 = vmatpush2.msra.mxu0 0.0
  %467 = vmatprep.mubr.f32.mxu0 0.0
  %468 = vmatmul.mubr.f32.gmra.mxu0 %v330
  %v469 = vpop.f32.mrf.mxu0
  %v470 = vadd.f32 0.0, %v469
  %v471 = vpop.f32.mrf.mxu0
  %472 = vdwg.mxu0
  %v474 = vsel %vm189, %v328, 0
  %476 = vmatprep.subr.mxu0 0.0
  %477 = vmatpush1.msra.mxu0 0.0
  %478 = vmatprep.subr.mxu0 0.0
  %479 = vmatpush1.msra.mxu0 0.0
  %480 = vmatprep.subr.mxu0 0.0
  %481 = vmatpush1.msra.mxu0 0.0
  %482 = vmatprep.subr.mxu0 0.0
  %483 = vmatpush1.msra.mxu0 0.0
  %484 = vmatprep.subr.mxu0 0.0
  %485 = vmatpush1.msra.mxu0 0.0
  %486 = vmatprep.subr.mxu0 0.0
  %487 = vmatpush1.msra.mxu0 0.0
  %488 = vmatprep.subr.mxu0 0.0
  %489 = vmatpush1.msra.mxu0 0.0
  %490 = vmatprep.subr.mxu0 0.0
  %491 = vmatpush1.msra.mxu0 0.0
  %492 = vmatprep.subr.mxu0 %v75
  %493 = vmatpush1.msra.mxu0 %v74
  %494 = vmatprep.subr.mxu0 %v72
  %495 = vmatpush1.msra.mxu0 %v71
  %496 = vmatprep.subr.mxu0 %v69
  %497 = vmatpush1.msra.mxu0 %v68
  %498 = vmatprep.subr.mxu0 %v66
  %499 = vmatpush1.msra.mxu0 %v65
  %500 = vmatprep.subr.mxu0 %v63
  %501 = vmatpush1.msra.mxu0 %v62
  %502 = vmatprep.subr.mxu0 %v60
  %503 = vmatpush1.msra.mxu0 %v59
  %504 = vmatprep.subr.mxu0 %v57
  %505 = vmatpush1.msra.mxu0 %v56
  %506 = vmatprep.subr.mxu0 %v54
  %507 = vmatpush1.msra.mxu0 %v53
  %508 = vmatprep.subr.mxu0 0.0
  %509 = vmatpush2.msra.mxu0 0.0
  %510 = vmatprep.subr.mxu0 0.0
  %511 = vmatpush2.msra.mxu0 0.0
  %512 = vmatprep.subr.mxu0 0.0
  %513 = vmatpush2.msra.mxu0 0.0
  %514 = vmatprep.subr.mxu0 0.0
  %515 = vmatpush2.msra.mxu0 0.0
  %516 = vmatprep.subr.mxu0 0.0
  %517 = vmatpush2.msra.mxu0 0.0
  %518 = vmatprep.subr.mxu0 0.0
  %519 = vmatpush2.msra.mxu0 0.0
  %520 = vmatprep.subr.mxu0 0.0
  %521 = vmatpush2.msra.mxu0 0.0
  %522 = vmatprep.subr.mxu0 0.0
  %523 = vmatpush2.msra.mxu0 0.0
  %524 = vmatprep.subr.mxu0 0.0
  %525 = vmatpush2.msra.mxu0 0.0
  %526 = vmatprep.subr.mxu0 0.0
  %527 = vmatpush2.msra.mxu0 0.0
  %528 = vmatprep.subr.mxu0 0.0
  %529 = vmatpush2.msra.mxu0 0.0
  %530 = vmatprep.subr.mxu0 0.0
  %531 = vmatpush2.msra.mxu0 0.0
  %532 = vmatprep.subr.mxu0 0.0
  %533 = vmatpush2.msra.mxu0 0.0
  %534 = vmatprep.subr.mxu0 0.0
  %535 = vmatpush2.msra.mxu0 0.0
  %536 = vmatprep.subr.mxu0 0.0
  %537 = vmatpush2.msra.mxu0 0.0
  %538 = vmatprep.subr.mxu0 0.0
  %539 = vmatpush2.msra.mxu0 0.0
  %540 = vmatprep.mubr.f32.mxu0 0.0
  %541 = vmatmul.mubr.f32.gmra.mxu0 %v474
  %v542 = vpop.f32.mrf.mxu0
  %v543 = vadd.f32 0.0, %v542
  %v544 = vpop.f32.mrf.mxu0
  %v545 = vadd.f32 0.0, %v544
  %546 = vdwg.mxu0
  %547 = vmatprep.subr.mxu0 0.0
  %548 = vmatpush1.msra.mxu0 0.0
  %549 = vmatprep.subr.mxu0 0.0
  %550 = vmatpush1.msra.mxu0 0.0
  %551 = vmatprep.subr.mxu0 0.0
  %552 = vmatpush1.msra.mxu0 0.0
  %553 = vmatprep.subr.mxu0 0.0
  %554 = vmatpush1.msra.mxu0 0.0
  %555 = vmatprep.subr.mxu0 0.0
  %556 = vmatpush1.msra.mxu0 0.0
  %557 = vmatprep.subr.mxu0 0.0
  %558 = vmatpush1.msra.mxu0 0.0
  %559 = vmatprep.subr.mxu0 0.0
  %560 = vmatpush1.msra.mxu0 0.0
  %561 = vmatprep.subr.mxu0 0.0
  %562 = vmatpush1.msra.mxu0 0.0
  %563 = vmatprep.subr.mxu0 0.0
  %564 = vmatpush1.msra.mxu0 %v76
  %565 = vmatprep.subr.mxu0 0.0
  %566 = vmatpush1.msra.mxu0 %v73
  %567 = vmatprep.subr.mxu0 0.0
  %568 = vmatpush1.msra.mxu0 %v70
  %569 = vmatprep.subr.mxu0 0.0
  %570 = vmatpush1.msra.mxu0 %v67
  %571 = vmatprep.subr.mxu0 0.0
  %572 = vmatpush1.msra.mxu0 %v64
  %573 = vmatprep.subr.mxu0 0.0
  %574 = vmatpush1.msra.mxu0 %v61
  %575 = vmatprep.subr.mxu0 0.0
  %576 = vmatpush1.msra.mxu0 %v58
  %577 = vmatprep.subr.mxu0 0.0
  %578 = vmatpush1.msra.mxu0 %v55
  %579 = vmatprep.subr.mxu0 0.0
  %580 = vmatpush2.msra.mxu0 0.0
  %581 = vmatprep.subr.mxu0 0.0
  %582 = vmatpush2.msra.mxu0 0.0
  %583 = vmatprep.subr.mxu0 0.0
  %584 = vmatpush2.msra.mxu0 0.0
  %585 = vmatprep.subr.mxu0 0.0
  %586 = vmatpush2.msra.mxu0 0.0
  %587 = vmatprep.subr.mxu0 0.0
  %588 = vmatpush2.msra.mxu0 0.0
  %589 = vmatprep.subr.mxu0 0.0
  %590 = vmatpush2.msra.mxu0 0.0
  %591 = vmatprep.subr.mxu0 0.0
  %592 = vmatpush2.msra.mxu0 0.0
  %593 = vmatprep.subr.mxu0 0.0
  %594 = vmatpush2.msra.mxu0 0.0
  %595 = vmatprep.subr.mxu0 0.0
  %596 = vmatpush2.msra.mxu0 0.0
  %597 = vmatprep.subr.mxu0 0.0
  %598 = vmatpush2.msra.mxu0 0.0
  %599 = vmatprep.subr.mxu0 0.0
  %600 = vmatpush2.msra.mxu0 0.0
  %601 = vmatprep.subr.mxu0 0.0
  %602 = vmatpush2.msra.mxu0 0.0
  %603 = vmatprep.subr.mxu0 0.0
  %604 = vmatpush2.msra.mxu0 0.0
  %605 = vmatprep.subr.mxu0 0.0
  %606 = vmatpush2.msra.mxu0 0.0
  %607 = vmatprep.subr.mxu0 0.0
  %608 = vmatpush2.msra.mxu0 0.0
  %609 = vmatprep.subr.mxu0 0.0
  %610 = vmatpush2.msra.mxu0 0.0
  %611 = vmatprep.mubr.f32.mxu0 0.0
  %612 = vmatmul.mubr.f32.gmra.mxu0 %v474
  %v613 = vpop.f32.mrf.mxu0
  %v614 = vadd.f32 0.0, %v613
  %v615 = vpop.f32.mrf.mxu0
  %616 = vdwg.mxu0
  %v617 = vadd.f32 %v399, %v543
  %v618 = vlaneseq
  %v619 = vshrl.u32 %v618, 7
  %v620 = vsub.s32 0, %v619
  %v621 = vrot.slane %v24, %v620
  %v622 = vadd.f32 %v617, %v621
  %v623 = vxor.u32 %v622, 2147483648
  %v624 = vmul.f32 %v623, 1.442695
  %v625 = vpow.pop %v624
  %v626 = vadd.f32 %v625, 1.0
  %v627 = vrcp.pop %v626
  %v628 = vmul.f32 1.0, %v627
  %v629 = vadd.f32 %v401, %v545
  %v630 = vlaneseq
  %v631 = vshrl.u32 %v630, 7
  %v632 = vsub.s32 0, %v631
  %v633 = vrot.slane %v25, %v632
  %v634 = vadd.f32 %v629, %v633
  %v635 = vxor.u32 %v634, 2147483648
  %v636 = vmul.f32 %v635, 1.442695
  %v637 = vpow.pop %v636
  %v638 = vadd.f32 %v637, 1.0
  %v639 = vrcp.pop %v638
  %v640 = vmul.f32 1.0, %v639
  %v641 = vlaneseq
  %v642 = vshrl.u32 %v641, 7
  %v643 = vsub.s32 0, %v642
  %v644 = vrot.slane %v26, %v643
  %v645 = vadd.f32 %v470, %v644
  %v646 = vlaneseq
  %v647 = vshrl.u32 %v646, 7
  %v648 = vsub.s32 0, %v647
  %v649 = vrot.slane %v27, %v648
  %v650 = vadd.f32 %v614, %v649
  %v651 = vmul.f32 %v628, %v650
  %v652 = vadd.f32 %v645, %v651
  %v653 = vtanh.pop %v652
  %v654 = vsub.f32 1.0, %v640
  %v655 = vmul.f32 %v654, %v653
  %v656 = vmul.f32 %v640, %v328
  %v657 = vadd.f32 %v655, %v656
  %v658 = vsel %vm189, %v657, 0.0
  %659 = vadd.xlane.f32.xlu0 %v658
  %v660 = vpop.xlane.xlu0 %659
  %v661 = vmul.f32 %v657, %v657
  %v662 = vsel %vm189, %v661, 0.0
  %663 = vadd.xlane.f32.xlu0 %v662
  %v664 = vpop.xlane.xlu0 %663
  %v665 = vmul.f32 %v660, 0.015625
  %v666 = vmul.f32 %v664, 0.015625
  %v667 = vmul.f32 %v665, %v665
  %v668 = vsub.f32 %v666, %v667
  %v669 = vmax.f32 %v668, 0.0
  %v670 = vsub.f32 %v657, %v665
  %v671 = vadd.f32 %v669, 1e-05
  %v672 = vrsqrt.pop %v671
  %v673 = vmul.f32 %v670, %v672
  %v674 = vlaneseq
  %v675 = vshrl.u32 %v674, 7
  %v676 = vsub.s32 0, %v675
  %v677 = vrot.slane %v22, %v676
  %v678 = vmul.f32 %v673, %v677
  %v679 = vlaneseq
  %v680 = vshrl.u32 %v679, 7
  %v681 = vsub.s32 0, %v680
  %v682 = vrot.slane %v23, %v681
  %v683 = vadd.f32 %v678, %v682
  %v684 = vmul.f32 %v683, 0.33333334
  %v685 = vmul.f32 %v657, %v79
  %v687 = vsel %vm189, %v684, 0
  %689 = vmatprep.subr.mxu0 0.0
  %690 = vmatpush1.msra.mxu0 0.0
  %691 = vmatprep.subr.mxu0 0.0
  %692 = vmatpush1.msra.mxu0 0.0
  %693 = vmatprep.subr.mxu0 0.0
  %694 = vmatpush1.msra.mxu0 0.0
  %695 = vmatprep.subr.mxu0 0.0
  %696 = vmatpush1.msra.mxu0 0.0
  %697 = vmatprep.subr.mxu0 0.0
  %698 = vmatpush1.msra.mxu0 0.0
  %699 = vmatprep.subr.mxu0 0.0
  %700 = vmatpush1.msra.mxu0 0.0
  %701 = vmatprep.subr.mxu0 0.0
  %702 = vmatpush1.msra.mxu0 0.0
  %703 = vmatprep.subr.mxu0 0.0
  %704 = vmatpush1.msra.mxu0 0.0
  %705 = vmatprep.subr.mxu0 %v51
  %706 = vmatpush1.msra.mxu0 %v50
  %707 = vmatprep.subr.mxu0 %v48
  %708 = vmatpush1.msra.mxu0 %v47
  %709 = vmatprep.subr.mxu0 %v45
  %710 = vmatpush1.msra.mxu0 %v44
  %711 = vmatprep.subr.mxu0 %v42
  %712 = vmatpush1.msra.mxu0 %v41
  %713 = vmatprep.subr.mxu0 %v39
  %714 = vmatpush1.msra.mxu0 %v38
  %715 = vmatprep.subr.mxu0 %v36
  %716 = vmatpush1.msra.mxu0 %v35
  %717 = vmatprep.subr.mxu0 %v33
  %718 = vmatpush1.msra.mxu0 %v32
  %719 = vmatprep.subr.mxu0 %v30
  %720 = vmatpush1.msra.mxu0 %v29
  %721 = vmatprep.subr.mxu0 0.0
  %722 = vmatpush2.msra.mxu0 0.0
  %723 = vmatprep.subr.mxu0 0.0
  %724 = vmatpush2.msra.mxu0 0.0
  %725 = vmatprep.subr.mxu0 0.0
  %726 = vmatpush2.msra.mxu0 0.0
  %727 = vmatprep.subr.mxu0 0.0
  %728 = vmatpush2.msra.mxu0 0.0
  %729 = vmatprep.subr.mxu0 0.0
  %730 = vmatpush2.msra.mxu0 0.0
  %731 = vmatprep.subr.mxu0 0.0
  %732 = vmatpush2.msra.mxu0 0.0
  %733 = vmatprep.subr.mxu0 0.0
  %734 = vmatpush2.msra.mxu0 0.0
  %735 = vmatprep.subr.mxu0 0.0
  %736 = vmatpush2.msra.mxu0 0.0
  %737 = vmatprep.subr.mxu0 0.0
  %738 = vmatpush2.msra.mxu0 0.0
  %739 = vmatprep.subr.mxu0 0.0
  %740 = vmatpush2.msra.mxu0 0.0
  %741 = vmatprep.subr.mxu0 0.0
  %742 = vmatpush2.msra.mxu0 0.0
  %743 = vmatprep.subr.mxu0 0.0
  %744 = vmatpush2.msra.mxu0 0.0
  %745 = vmatprep.subr.mxu0 0.0
  %746 = vmatpush2.msra.mxu0 0.0
  %747 = vmatprep.subr.mxu0 0.0
  %748 = vmatpush2.msra.mxu0 0.0
  %749 = vmatprep.subr.mxu0 0.0
  %750 = vmatpush2.msra.mxu0 0.0
  %751 = vmatprep.subr.mxu0 0.0
  %752 = vmatpush2.msra.mxu0 0.0
  %753 = vmatprep.mubr.f32.mxu0 0.0
  %754 = vmatmul.mubr.f32.gmra.mxu0 %v687
  %v755 = vpop.f32.mrf.mxu0
  %v756 = vadd.f32 0.0, %v755
  %v757 = vpop.f32.mrf.mxu0
  %v758 = vadd.f32 0.0, %v757
  %759 = vdwg.mxu0
  %760 = vmatprep.subr.mxu0 0.0
  %761 = vmatpush1.msra.mxu0 0.0
  %762 = vmatprep.subr.mxu0 0.0
  %763 = vmatpush1.msra.mxu0 0.0
  %764 = vmatprep.subr.mxu0 0.0
  %765 = vmatpush1.msra.mxu0 0.0
  %766 = vmatprep.subr.mxu0 0.0
  %767 = vmatpush1.msra.mxu0 0.0
  %768 = vmatprep.subr.mxu0 0.0
  %769 = vmatpush1.msra.mxu0 0.0
  %770 = vmatprep.subr.mxu0 0.0
  %771 = vmatpush1.msra.mxu0 0.0
  %772 = vmatprep.subr.mxu0 0.0
  %773 = vmatpush1.msra.mxu0 0.0
  %774 = vmatprep.subr.mxu0 0.0
  %775 = vmatpush1.msra.mxu0 0.0
  %776 = vmatprep.subr.mxu0 0.0
  %777 = vmatpush1.msra.mxu0 %v52
  %778 = vmatprep.subr.mxu0 0.0
  %779 = vmatpush1.msra.mxu0 %v49
  %780 = vmatprep.subr.mxu0 0.0
  %781 = vmatpush1.msra.mxu0 %v46
  %782 = vmatprep.subr.mxu0 0.0
  %783 = vmatpush1.msra.mxu0 %v43
  %784 = vmatprep.subr.mxu0 0.0
  %785 = vmatpush1.msra.mxu0 %v40
  %786 = vmatprep.subr.mxu0 0.0
  %787 = vmatpush1.msra.mxu0 %v37
  %788 = vmatprep.subr.mxu0 0.0
  %789 = vmatpush1.msra.mxu0 %v34
  %790 = vmatprep.subr.mxu0 0.0
  %791 = vmatpush1.msra.mxu0 %v31
  %792 = vmatprep.subr.mxu0 0.0
  %793 = vmatpush2.msra.mxu0 0.0
  %794 = vmatprep.subr.mxu0 0.0
  %795 = vmatpush2.msra.mxu0 0.0
  %796 = vmatprep.subr.mxu0 0.0
  %797 = vmatpush2.msra.mxu0 0.0
  %798 = vmatprep.subr.mxu0 0.0
  %799 = vmatpush2.msra.mxu0 0.0
  %800 = vmatprep.subr.mxu0 0.0
  %801 = vmatpush2.msra.mxu0 0.0
  %802 = vmatprep.subr.mxu0 0.0
  %803 = vmatpush2.msra.mxu0 0.0
  %804 = vmatprep.subr.mxu0 0.0
  %805 = vmatpush2.msra.mxu0 0.0
  %806 = vmatprep.subr.mxu0 0.0
  %807 = vmatpush2.msra.mxu0 0.0
  %808 = vmatprep.subr.mxu0 0.0
  %809 = vmatpush2.msra.mxu0 0.0
  %810 = vmatprep.subr.mxu0 0.0
  %811 = vmatpush2.msra.mxu0 0.0
  %812 = vmatprep.subr.mxu0 0.0
  %813 = vmatpush2.msra.mxu0 0.0
  %814 = vmatprep.subr.mxu0 0.0
  %815 = vmatpush2.msra.mxu0 0.0
  %816 = vmatprep.subr.mxu0 0.0
  %817 = vmatpush2.msra.mxu0 0.0
  %818 = vmatprep.subr.mxu0 0.0
  %819 = vmatpush2.msra.mxu0 0.0
  %820 = vmatprep.subr.mxu0 0.0
  %821 = vmatpush2.msra.mxu0 0.0
  %822 = vmatprep.subr.mxu0 0.0
  %823 = vmatpush2.msra.mxu0 0.0
  %824 = vmatprep.mubr.f32.mxu0 0.0
  %825 = vmatmul.mubr.f32.gmra.mxu0 %v687
  %v826 = vpop.f32.mrf.mxu0
  %v827 = vadd.f32 0.0, %v826
  %v828 = vpop.f32.mrf.mxu0
  %829 = vdwg.mxu0
  %v831 = vsel %vm189, %v685, 0
  %833 = vmatprep.subr.mxu0 0.0
  %834 = vmatpush1.msra.mxu0 0.0
  %835 = vmatprep.subr.mxu0 0.0
  %836 = vmatpush1.msra.mxu0 0.0
  %837 = vmatprep.subr.mxu0 0.0
  %838 = vmatpush1.msra.mxu0 0.0
  %839 = vmatprep.subr.mxu0 0.0
  %840 = vmatpush1.msra.mxu0 0.0
  %841 = vmatprep.subr.mxu0 0.0
  %842 = vmatpush1.msra.mxu0 0.0
  %843 = vmatprep.subr.mxu0 0.0
  %844 = vmatpush1.msra.mxu0 0.0
  %845 = vmatprep.subr.mxu0 0.0
  %846 = vmatpush1.msra.mxu0 0.0
  %847 = vmatprep.subr.mxu0 0.0
  %848 = vmatpush1.msra.mxu0 0.0
  %849 = vmatprep.subr.mxu0 %v75
  %850 = vmatpush1.msra.mxu0 %v74
  %851 = vmatprep.subr.mxu0 %v72
  %852 = vmatpush1.msra.mxu0 %v71
  %853 = vmatprep.subr.mxu0 %v69
  %854 = vmatpush1.msra.mxu0 %v68
  %855 = vmatprep.subr.mxu0 %v66
  %856 = vmatpush1.msra.mxu0 %v65
  %857 = vmatprep.subr.mxu0 %v63
  %858 = vmatpush1.msra.mxu0 %v62
  %859 = vmatprep.subr.mxu0 %v60
  %860 = vmatpush1.msra.mxu0 %v59
  %861 = vmatprep.subr.mxu0 %v57
  %862 = vmatpush1.msra.mxu0 %v56
  %863 = vmatprep.subr.mxu0 %v54
  %864 = vmatpush1.msra.mxu0 %v53
  %865 = vmatprep.subr.mxu0 0.0
  %866 = vmatpush2.msra.mxu0 0.0
  %867 = vmatprep.subr.mxu0 0.0
  %868 = vmatpush2.msra.mxu0 0.0
  %869 = vmatprep.subr.mxu0 0.0
  %870 = vmatpush2.msra.mxu0 0.0
  %871 = vmatprep.subr.mxu0 0.0
  %872 = vmatpush2.msra.mxu0 0.0
  %873 = vmatprep.subr.mxu0 0.0
  %874 = vmatpush2.msra.mxu0 0.0
  %875 = vmatprep.subr.mxu0 0.0
  %876 = vmatpush2.msra.mxu0 0.0
  %877 = vmatprep.subr.mxu0 0.0
  %878 = vmatpush2.msra.mxu0 0.0
  %879 = vmatprep.subr.mxu0 0.0
  %880 = vmatpush2.msra.mxu0 0.0
  %881 = vmatprep.subr.mxu0 0.0
  %882 = vmatpush2.msra.mxu0 0.0
  %883 = vmatprep.subr.mxu0 0.0
  %884 = vmatpush2.msra.mxu0 0.0
  %885 = vmatprep.subr.mxu0 0.0
  %886 = vmatpush2.msra.mxu0 0.0
  %887 = vmatprep.subr.mxu0 0.0
  %888 = vmatpush2.msra.mxu0 0.0
  %889 = vmatprep.subr.mxu0 0.0
  %890 = vmatpush2.msra.mxu0 0.0
  %891 = vmatprep.subr.mxu0 0.0
  %892 = vmatpush2.msra.mxu0 0.0
  %893 = vmatprep.subr.mxu0 0.0
  %894 = vmatpush2.msra.mxu0 0.0
  %895 = vmatprep.subr.mxu0 0.0
  %896 = vmatpush2.msra.mxu0 0.0
  %897 = vmatprep.mubr.f32.mxu0 0.0
  %898 = vmatmul.mubr.f32.gmra.mxu0 %v831
  %v899 = vpop.f32.mrf.mxu0
  %v900 = vadd.f32 0.0, %v899
  %v901 = vpop.f32.mrf.mxu0
  %v902 = vadd.f32 0.0, %v901
  %903 = vdwg.mxu0
  %904 = vmatprep.subr.mxu0 0.0
  %905 = vmatpush1.msra.mxu0 0.0
  %906 = vmatprep.subr.mxu0 0.0
  %907 = vmatpush1.msra.mxu0 0.0
  %908 = vmatprep.subr.mxu0 0.0
  %909 = vmatpush1.msra.mxu0 0.0
  %910 = vmatprep.subr.mxu0 0.0
  %911 = vmatpush1.msra.mxu0 0.0
  %912 = vmatprep.subr.mxu0 0.0
  %913 = vmatpush1.msra.mxu0 0.0
  %914 = vmatprep.subr.mxu0 0.0
  %915 = vmatpush1.msra.mxu0 0.0
  %916 = vmatprep.subr.mxu0 0.0
  %917 = vmatpush1.msra.mxu0 0.0
  %918 = vmatprep.subr.mxu0 0.0
  %919 = vmatpush1.msra.mxu0 0.0
  %920 = vmatprep.subr.mxu0 0.0
  %921 = vmatpush1.msra.mxu0 %v76
  %922 = vmatprep.subr.mxu0 0.0
  %923 = vmatpush1.msra.mxu0 %v73
  %924 = vmatprep.subr.mxu0 0.0
  %925 = vmatpush1.msra.mxu0 %v70
  %926 = vmatprep.subr.mxu0 0.0
  %927 = vmatpush1.msra.mxu0 %v67
  %928 = vmatprep.subr.mxu0 0.0
  %929 = vmatpush1.msra.mxu0 %v64
  %930 = vmatprep.subr.mxu0 0.0
  %931 = vmatpush1.msra.mxu0 %v61
  %932 = vmatprep.subr.mxu0 0.0
  %933 = vmatpush1.msra.mxu0 %v58
  %934 = vmatprep.subr.mxu0 0.0
  %935 = vmatpush1.msra.mxu0 %v55
  %936 = vmatprep.subr.mxu0 0.0
  %937 = vmatpush2.msra.mxu0 0.0
  %938 = vmatprep.subr.mxu0 0.0
  %939 = vmatpush2.msra.mxu0 0.0
  %940 = vmatprep.subr.mxu0 0.0
  %941 = vmatpush2.msra.mxu0 0.0
  %942 = vmatprep.subr.mxu0 0.0
  %943 = vmatpush2.msra.mxu0 0.0
  %944 = vmatprep.subr.mxu0 0.0
  %945 = vmatpush2.msra.mxu0 0.0
  %946 = vmatprep.subr.mxu0 0.0
  %947 = vmatpush2.msra.mxu0 0.0
  %948 = vmatprep.subr.mxu0 0.0
  %949 = vmatpush2.msra.mxu0 0.0
  %950 = vmatprep.subr.mxu0 0.0
  %951 = vmatpush2.msra.mxu0 0.0
  %952 = vmatprep.subr.mxu0 0.0
  %953 = vmatpush2.msra.mxu0 0.0
  %954 = vmatprep.subr.mxu0 0.0
  %955 = vmatpush2.msra.mxu0 0.0
  %956 = vmatprep.subr.mxu0 0.0
  %957 = vmatpush2.msra.mxu0 0.0
  %958 = vmatprep.subr.mxu0 0.0
  %959 = vmatpush2.msra.mxu0 0.0
  %960 = vmatprep.subr.mxu0 0.0
  %961 = vmatpush2.msra.mxu0 0.0
  %962 = vmatprep.subr.mxu0 0.0
  %963 = vmatpush2.msra.mxu0 0.0
  %964 = vmatprep.subr.mxu0 0.0
  %965 = vmatpush2.msra.mxu0 0.0
  %966 = vmatprep.subr.mxu0 0.0
  %967 = vmatpush2.msra.mxu0 0.0
  %968 = vmatprep.mubr.f32.mxu0 0.0
  %969 = vmatmul.mubr.f32.gmra.mxu0 %v831
  %v970 = vpop.f32.mrf.mxu0
  %v971 = vadd.f32 0.0, %v970
  %v972 = vpop.f32.mrf.mxu0
  %973 = vdwg.mxu0
  %v974 = vadd.f32 %v756, %v900
  %v975 = vadd.f32 %v974, %v621
  %v976 = vxor.u32 %v975, 2147483648
  %v977 = vmul.f32 %v976, 1.442695
  %v978 = vpow.pop %v977
  %v979 = vadd.f32 %v978, 1.0
  %v980 = vrcp.pop %v979
  %v981 = vmul.f32 1.0, %v980
  %v982 = vadd.f32 %v758, %v902
  %v983 = vadd.f32 %v982, %v633
  %v984 = vxor.u32 %v983, 2147483648
  %v985 = vmul.f32 %v984, 1.442695
  %v986 = vpow.pop %v985
  %v987 = vadd.f32 %v986, 1.0
  %v988 = vrcp.pop %v987
  %v989 = vmul.f32 1.0, %v988
  %v990 = vadd.f32 %v827, %v644
  %v991 = vadd.f32 %v971, %v649
  %v992 = vmul.f32 %v981, %v991
  %v993 = vadd.f32 %v990, %v992
  %v994 = vtanh.pop %v993
  %v995 = vsub.f32 1.0, %v989
  %v996 = vmul.f32 %v995, %v994
  %v997 = vmul.f32 %v989, %v685
  %v998 = vadd.f32 %v996, %v997
  %v999 = vsel %vm189, %v998, 0.0
  %1000 = vadd.xlane.f32.xlu0 %v999
  %v1001 = vpop.xlane.xlu0 %1000
  %v1002 = vmul.f32 %v998, %v998
  %v1003 = vsel %vm189, %v1002, 0.0
  %1004 = vadd.xlane.f32.xlu0 %v1003
  %v1005 = vpop.xlane.xlu0 %1004
  %v1006 = vmul.f32 %v1001, 0.015625
  %v1007 = vmul.f32 %v1005, 0.015625
  %v1008 = vmul.f32 %v1006, %v1006
  %v1009 = vsub.f32 %v1007, %v1008
  %v1010 = vmax.f32 %v1009, 0.0
  %v1011 = vsub.f32 %v998, %v1006
  %v1012 = vadd.f32 %v1010, 1e-05
  %v1013 = vrsqrt.pop %v1012
  %v1014 = vmul.f32 %v1011, %v1013
  %v1015 = vmul.f32 %v1014, %v677
  %v1016 = vadd.f32 %v1015, %v682
  %v1017 = vmul.f32 %v684, 0.6666667
  %v1018 = vmul.f32 %v1016, 0.33333334
  %v1019 = vadd.f32 %v1017, %v1018
  %v1020 = vmul.f32 %v998, %v79
  %v1022 = vsel %vm189, %v1019, 0
  %1024 = vmatprep.subr.mxu0 0.0
  %1025 = vmatpush1.msra.mxu0 0.0
  %1026 = vmatprep.subr.mxu0 0.0
  %1027 = vmatpush1.msra.mxu0 0.0
  %1028 = vmatprep.subr.mxu0 0.0
  %1029 = vmatpush1.msra.mxu0 0.0
  %1030 = vmatprep.subr.mxu0 0.0
  %1031 = vmatpush1.msra.mxu0 0.0
  %1032 = vmatprep.subr.mxu0 0.0
  %1033 = vmatpush1.msra.mxu0 0.0
  %1034 = vmatprep.subr.mxu0 0.0
  %1035 = vmatpush1.msra.mxu0 0.0
  %1036 = vmatprep.subr.mxu0 0.0
  %1037 = vmatpush1.msra.mxu0 0.0
  %1038 = vmatprep.subr.mxu0 0.0
  %1039 = vmatpush1.msra.mxu0 0.0
  %1040 = vmatprep.subr.mxu0 %v51
  %1041 = vmatpush1.msra.mxu0 %v50
  %1042 = vmatprep.subr.mxu0 %v48
  %1043 = vmatpush1.msra.mxu0 %v47
  %1044 = vmatprep.subr.mxu0 %v45
  %1045 = vmatpush1.msra.mxu0 %v44
  %1046 = vmatprep.subr.mxu0 %v42
  %1047 = vmatpush1.msra.mxu0 %v41
  %1048 = vmatprep.subr.mxu0 %v39
  %1049 = vmatpush1.msra.mxu0 %v38
  %1050 = vmatprep.subr.mxu0 %v36
  %1051 = vmatpush1.msra.mxu0 %v35
  %1052 = vmatprep.subr.mxu0 %v33
  %1053 = vmatpush1.msra.mxu0 %v32
  %1054 = vmatprep.subr.mxu0 %v30
  %1055 = vmatpush1.msra.mxu0 %v29
  %1056 = vmatprep.subr.mxu0 0.0
  %1057 = vmatpush2.msra.mxu0 0.0
  %1058 = vmatprep.subr.mxu0 0.0
  %1059 = vmatpush2.msra.mxu0 0.0
  %1060 = vmatprep.subr.mxu0 0.0
  %1061 = vmatpush2.msra.mxu0 0.0
  %1062 = vmatprep.subr.mxu0 0.0
  %1063 = vmatpush2.msra.mxu0 0.0
  %1064 = vmatprep.subr.mxu0 0.0
  %1065 = vmatpush2.msra.mxu0 0.0
  %1066 = vmatprep.subr.mxu0 0.0
  %1067 = vmatpush2.msra.mxu0 0.0
  %1068 = vmatprep.subr.mxu0 0.0
  %1069 = vmatpush2.msra.mxu0 0.0
  %1070 = vmatprep.subr.mxu0 0.0
  %1071 = vmatpush2.msra.mxu0 0.0
  %1072 = vmatprep.subr.mxu0 0.0
  %1073 = vmatpush2.msra.mxu0 0.0
  %1074 = vmatprep.subr.mxu0 0.0
  %1075 = vmatpush2.msra.mxu0 0.0
  %1076 = vmatprep.subr.mxu0 0.0
  %1077 = vmatpush2.msra.mxu0 0.0
  %1078 = vmatprep.subr.mxu0 0.0
  %1079 = vmatpush2.msra.mxu0 0.0
  %1080 = vmatprep.subr.mxu0 0.0
  %1081 = vmatpush2.msra.mxu0 0.0
  %1082 = vmatprep.subr.mxu0 0.0
  %1083 = vmatpush2.msra.mxu0 0.0
  %1084 = vmatprep.subr.mxu0 0.0
  %1085 = vmatpush2.msra.mxu0 0.0
  %1086 = vmatprep.subr.mxu0 0.0
  %1087 = vmatpush2.msra.mxu0 0.0
  %1088 = vmatprep.mubr.f32.mxu0 0.0
  %1089 = vmatmul.mubr.f32.gmra.mxu0 %v1022
  %v1090 = vpop.f32.mrf.mxu0
  %v1091 = vadd.f32 0.0, %v1090
  %v1092 = vpop.f32.mrf.mxu0
  %v1093 = vadd.f32 0.0, %v1092
  %1094 = vdwg.mxu0
  %1095 = vmatprep.subr.mxu0 0.0
  %1096 = vmatpush1.msra.mxu0 0.0
  %1097 = vmatprep.subr.mxu0 0.0
  %1098 = vmatpush1.msra.mxu0 0.0
  %1099 = vmatprep.subr.mxu0 0.0
  %1100 = vmatpush1.msra.mxu0 0.0
  %1101 = vmatprep.subr.mxu0 0.0
  %1102 = vmatpush1.msra.mxu0 0.0
  %1103 = vmatprep.subr.mxu0 0.0
  %1104 = vmatpush1.msra.mxu0 0.0
  %1105 = vmatprep.subr.mxu0 0.0
  %1106 = vmatpush1.msra.mxu0 0.0
  %1107 = vmatprep.subr.mxu0 0.0
  %1108 = vmatpush1.msra.mxu0 0.0
  %1109 = vmatprep.subr.mxu0 0.0
  %1110 = vmatpush1.msra.mxu0 0.0
  %1111 = vmatprep.subr.mxu0 0.0
  %1112 = vmatpush1.msra.mxu0 %v52
  %1113 = vmatprep.subr.mxu0 0.0
  %1114 = vmatpush1.msra.mxu0 %v49
  %1115 = vmatprep.subr.mxu0 0.0
  %1116 = vmatpush1.msra.mxu0 %v46
  %1117 = vmatprep.subr.mxu0 0.0
  %1118 = vmatpush1.msra.mxu0 %v43
  %1119 = vmatprep.subr.mxu0 0.0
  %1120 = vmatpush1.msra.mxu0 %v40
  %1121 = vmatprep.subr.mxu0 0.0
  %1122 = vmatpush1.msra.mxu0 %v37
  %1123 = vmatprep.subr.mxu0 0.0
  %1124 = vmatpush1.msra.mxu0 %v34
  %1125 = vmatprep.subr.mxu0 0.0
  %1126 = vmatpush1.msra.mxu0 %v31
  %1127 = vmatprep.subr.mxu0 0.0
  %1128 = vmatpush2.msra.mxu0 0.0
  %1129 = vmatprep.subr.mxu0 0.0
  %1130 = vmatpush2.msra.mxu0 0.0
  %1131 = vmatprep.subr.mxu0 0.0
  %1132 = vmatpush2.msra.mxu0 0.0
  %1133 = vmatprep.subr.mxu0 0.0
  %1134 = vmatpush2.msra.mxu0 0.0
  %1135 = vmatprep.subr.mxu0 0.0
  %1136 = vmatpush2.msra.mxu0 0.0
  %1137 = vmatprep.subr.mxu0 0.0
  %1138 = vmatpush2.msra.mxu0 0.0
  %1139 = vmatprep.subr.mxu0 0.0
  %1140 = vmatpush2.msra.mxu0 0.0
  %1141 = vmatprep.subr.mxu0 0.0
  %1142 = vmatpush2.msra.mxu0 0.0
  %1143 = vmatprep.subr.mxu0 0.0
  %1144 = vmatpush2.msra.mxu0 0.0
  %1145 = vmatprep.subr.mxu0 0.0
  %1146 = vmatpush2.msra.mxu0 0.0
  %1147 = vmatprep.subr.mxu0 0.0
  %1148 = vmatpush2.msra.mxu0 0.0
  %1149 = vmatprep.subr.mxu0 0.0
  %1150 = vmatpush2.msra.mxu0 0.0
  %1151 = vmatprep.subr.mxu0 0.0
  %1152 = vmatpush2.msra.mxu0 0.0
  %1153 = vmatprep.subr.mxu0 0.0
  %1154 = vmatpush2.msra.mxu0 0.0
  %1155 = vmatprep.subr.mxu0 0.0
  %1156 = vmatpush2.msra.mxu0 0.0
  %1157 = vmatprep.subr.mxu0 0.0
  %1158 = vmatpush2.msra.mxu0 0.0
  %1159 = vmatprep.mubr.f32.mxu0 0.0
  %1160 = vmatmul.mubr.f32.gmra.mxu0 %v1022
  %v1161 = vpop.f32.mrf.mxu0
  %v1162 = vadd.f32 0.0, %v1161
  %v1163 = vpop.f32.mrf.mxu0
  %1164 = vdwg.mxu0
  %v1166 = vsel %vm189, %v1020, 0
  %1168 = vmatprep.subr.mxu0 0.0
  %1169 = vmatpush1.msra.mxu0 0.0
  %1170 = vmatprep.subr.mxu0 0.0
  %1171 = vmatpush1.msra.mxu0 0.0
  %1172 = vmatprep.subr.mxu0 0.0
  %1173 = vmatpush1.msra.mxu0 0.0
  %1174 = vmatprep.subr.mxu0 0.0
  %1175 = vmatpush1.msra.mxu0 0.0
  %1176 = vmatprep.subr.mxu0 0.0
  %1177 = vmatpush1.msra.mxu0 0.0
  %1178 = vmatprep.subr.mxu0 0.0
  %1179 = vmatpush1.msra.mxu0 0.0
  %1180 = vmatprep.subr.mxu0 0.0
  %1181 = vmatpush1.msra.mxu0 0.0
  %1182 = vmatprep.subr.mxu0 0.0
  %1183 = vmatpush1.msra.mxu0 0.0
  %1184 = vmatprep.subr.mxu0 %v75
  %1185 = vmatpush1.msra.mxu0 %v74
  %1186 = vmatprep.subr.mxu0 %v72
  %1187 = vmatpush1.msra.mxu0 %v71
  %1188 = vmatprep.subr.mxu0 %v69
  %1189 = vmatpush1.msra.mxu0 %v68
  %1190 = vmatprep.subr.mxu0 %v66
  %1191 = vmatpush1.msra.mxu0 %v65
  %1192 = vmatprep.subr.mxu0 %v63
  %1193 = vmatpush1.msra.mxu0 %v62
  %1194 = vmatprep.subr.mxu0 %v60
  %1195 = vmatpush1.msra.mxu0 %v59
  %1196 = vmatprep.subr.mxu0 %v57
  %1197 = vmatpush1.msra.mxu0 %v56
  %1198 = vmatprep.subr.mxu0 %v54
  %1199 = vmatpush1.msra.mxu0 %v53
  %1200 = vmatprep.subr.mxu0 0.0
  %1201 = vmatpush2.msra.mxu0 0.0
  %1202 = vmatprep.subr.mxu0 0.0
  %1203 = vmatpush2.msra.mxu0 0.0
  %1204 = vmatprep.subr.mxu0 0.0
  %1205 = vmatpush2.msra.mxu0 0.0
  %1206 = vmatprep.subr.mxu0 0.0
  %1207 = vmatpush2.msra.mxu0 0.0
  %1208 = vmatprep.subr.mxu0 0.0
  %1209 = vmatpush2.msra.mxu0 0.0
  %1210 = vmatprep.subr.mxu0 0.0
  %1211 = vmatpush2.msra.mxu0 0.0
  %1212 = vmatprep.subr.mxu0 0.0
  %1213 = vmatpush2.msra.mxu0 0.0
  %1214 = vmatprep.subr.mxu0 0.0
  %1215 = vmatpush2.msra.mxu0 0.0
  %1216 = vmatprep.subr.mxu0 0.0
  %1217 = vmatpush2.msra.mxu0 0.0
  %1218 = vmatprep.subr.mxu0 0.0
  %1219 = vmatpush2.msra.mxu0 0.0
  %1220 = vmatprep.subr.mxu0 0.0
  %1221 = vmatpush2.msra.mxu0 0.0
  %1222 = vmatprep.subr.mxu0 0.0
  %1223 = vmatpush2.msra.mxu0 0.0
  %1224 = vmatprep.subr.mxu0 0.0
  %1225 = vmatpush2.msra.mxu0 0.0
  %1226 = vmatprep.subr.mxu0 0.0
  %1227 = vmatpush2.msra.mxu0 0.0
  %1228 = vmatprep.subr.mxu0 0.0
  %1229 = vmatpush2.msra.mxu0 0.0
  %1230 = vmatprep.subr.mxu0 0.0
  %1231 = vmatpush2.msra.mxu0 0.0
  %1232 = vmatprep.mubr.f32.mxu0 0.0
  %1233 = vmatmul.mubr.f32.gmra.mxu0 %v1166
  %v1234 = vpop.f32.mrf.mxu0
  %v1235 = vadd.f32 0.0, %v1234
  %v1236 = vpop.f32.mrf.mxu0
  %v1237 = vadd.f32 0.0, %v1236
  %1238 = vdwg.mxu0
  %1239 = vmatprep.subr.mxu0 0.0
  %1240 = vmatpush1.msra.mxu0 0.0
  %1241 = vmatprep.subr.mxu0 0.0
  %1242 = vmatpush1.msra.mxu0 0.0
  %1243 = vmatprep.subr.mxu0 0.0
  %1244 = vmatpush1.msra.mxu0 0.0
  %1245 = vmatprep.subr.mxu0 0.0
  %1246 = vmatpush1.msra.mxu0 0.0
  %1247 = vmatprep.subr.mxu0 0.0
  %1248 = vmatpush1.msra.mxu0 0.0
  %1249 = vmatprep.subr.mxu0 0.0
  %1250 = vmatpush1.msra.mxu0 0.0
  %1251 = vmatprep.subr.mxu0 0.0
  %1252 = vmatpush1.msra.mxu0 0.0
  %1253 = vmatprep.subr.mxu0 0.0
  %1254 = vmatpush1.msra.mxu0 0.0
  %1255 = vmatprep.subr.mxu0 0.0
  %1256 = vmatpush1.msra.mxu0 %v76
  %1257 = vmatprep.subr.mxu0 0.0
  %1258 = vmatpush1.msra.mxu0 %v73
  %1259 = vmatprep.subr.mxu0 0.0
  %1260 = vmatpush1.msra.mxu0 %v70
  %1261 = vmatprep.subr.mxu0 0.0
  %1262 = vmatpush1.msra.mxu0 %v67
  %1263 = vmatprep.subr.mxu0 0.0
  %1264 = vmatpush1.msra.mxu0 %v64
  %1265 = vmatprep.subr.mxu0 0.0
  %1266 = vmatpush1.msra.mxu0 %v61
  %1267 = vmatprep.subr.mxu0 0.0
  %1268 = vmatpush1.msra.mxu0 %v58
  %1269 = vmatprep.subr.mxu0 0.0
  %1270 = vmatpush1.msra.mxu0 %v55
  %1271 = vmatprep.subr.mxu0 0.0
  %1272 = vmatpush2.msra.mxu0 0.0
  %1273 = vmatprep.subr.mxu0 0.0
  %1274 = vmatpush2.msra.mxu0 0.0
  %1275 = vmatprep.subr.mxu0 0.0
  %1276 = vmatpush2.msra.mxu0 0.0
  %1277 = vmatprep.subr.mxu0 0.0
  %1278 = vmatpush2.msra.mxu0 0.0
  %1279 = vmatprep.subr.mxu0 0.0
  %1280 = vmatpush2.msra.mxu0 0.0
  %1281 = vmatprep.subr.mxu0 0.0
  %1282 = vmatpush2.msra.mxu0 0.0
  %1283 = vmatprep.subr.mxu0 0.0
  %1284 = vmatpush2.msra.mxu0 0.0
  %1285 = vmatprep.subr.mxu0 0.0
  %1286 = vmatpush2.msra.mxu0 0.0
  %1287 = vmatprep.subr.mxu0 0.0
  %1288 = vmatpush2.msra.mxu0 0.0
  %1289 = vmatprep.subr.mxu0 0.0
  %1290 = vmatpush2.msra.mxu0 0.0
  %1291 = vmatprep.subr.mxu0 0.0
  %1292 = vmatpush2.msra.mxu0 0.0
  %1293 = vmatprep.subr.mxu0 0.0
  %1294 = vmatpush2.msra.mxu0 0.0
  %1295 = vmatprep.subr.mxu0 0.0
  %1296 = vmatpush2.msra.mxu0 0.0
  %1297 = vmatprep.subr.mxu0 0.0
  %1298 = vmatpush2.msra.mxu0 0.0
  %1299 = vmatprep.subr.mxu0 0.0
  %1300 = vmatpush2.msra.mxu0 0.0
  %1301 = vmatprep.subr.mxu0 0.0
  %1302 = vmatpush2.msra.mxu0 0.0
  %1303 = vmatprep.mubr.f32.mxu0 0.0
  %1304 = vmatmul.mubr.f32.gmra.mxu0 %v1166
  %v1305 = vpop.f32.mrf.mxu0
  %v1306 = vadd.f32 0.0, %v1305
  %v1307 = vpop.f32.mrf.mxu0
  %1308 = vdwg.mxu0
  %v1309 = vadd.f32 %v1091, %v1235
  %v1310 = vadd.f32 %v1309, %v621
  %v1311 = vxor.u32 %v1310, 2147483648
  %v1312 = vmul.f32 %v1311, 1.442695
  %v1313 = vpow.pop %v1312
  %v1314 = vadd.f32 %v1313, 1.0
  %v1315 = vrcp.pop %v1314
  %v1316 = vmul.f32 1.0, %v1315
  %v1317 = vadd.f32 %v1093, %v1237
  %v1318 = vadd.f32 %v1317, %v633
  %v1319 = vxor.u32 %v1318, 2147483648
  %v1320 = vmul.f32 %v1319, 1.442695
  %v1321 = vpow.pop %v1320
  %v1322 = vadd.f32 %v1321, 1.0
  %v1323 = vrcp.pop %v1322
  %v1324 = vmul.f32 1.0, %v1323
  %v1325 = vadd.f32 %v1162, %v644
  %v1326 = vadd.f32 %v1306, %v649
  %v1327 = vmul.f32 %v1316, %v1326
  %v1328 = vadd.f32 %v1325, %v1327
  %v1329 = vtanh.pop %v1328
  %v1330 = vsub.f32 1.0, %v1324
  %v1331 = vmul.f32 %v1330, %v1329
  %v1332 = vmul.f32 %v1324, %v1020
  %v1333 = vadd.f32 %v1331, %v1332
  %v1334 = vsel %vm189, %v1333, 0.0
  %1335 = vadd.xlane.f32.xlu0 %v1334
  %v1336 = vpop.xlane.xlu0 %1335
  %v1337 = vmul.f32 %v1333, %v1333
  %v1338 = vsel %vm189, %v1337, 0.0
  %1339 = vadd.xlane.f32.xlu0 %v1338
  %v1340 = vpop.xlane.xlu0 %1339
  %v1341 = vmul.f32 %v1336, 0.015625
  %v1342 = vmul.f32 %v1340, 0.015625
  %v1343 = vmul.f32 %v1341, %v1341
  %v1344 = vsub.f32 %v1342, %v1343
  %v1345 = vmax.f32 %v1344, 0.0
  %v1346 = vsub.f32 %v1333, %v1341
  %v1347 = vadd.f32 %v1345, 1e-05
  %v1348 = vrsqrt.pop %v1347
  %v1349 = vmul.f32 %v1346, %v1348
  %v1350 = vmul.f32 %v1349, %v677
  %v1351 = vadd.f32 %v1350, %v682
  %v1352 = vmul.f32 %v1019, 0.6666667
  %v1353 = vmul.f32 %v1351, 0.33333334
  %v1354 = vadd.f32 %v1352, %v1353
  %v1355 = vld [vmem:[%s2 + $0x18] sm:$0xff]
  %v1356 = vld [vmem:[%s2 + $0x40] sm:$0xff]
  %v1357 = vld [vmem:[%s2 + $0x68] sm:$0xff]
  %v1358 = vld [vmem:[%s2 + $0x90] sm:$0xff]
  %v1359 = vld [vmem:[%s2 + $0xb8] sm:$0xff]
  %v1360 = vld [vmem:[%s2 + $0xe0] sm:$0xff]
  %v1361 = vld [vmem:[%s2 + $0x108] sm:$0xff]
  %v1362 = vld [vmem:[%s2 + $0x130] sm:$0xff]
  %v1363 = vld [vmem:[%s2 + $0x158] sm:$0xff]
  %v1364 = vld [vmem:[%s2 + $0x180] sm:$0xff]
  %v1365 = vld [vmem:[%s2 + $0x1a8] sm:$0xff]
  %v1366 = vld [vmem:[%s2 + $0x1d0] sm:$0xff]
  %v1367 = vld [vmem:[%s2 + $0x1f8] sm:$0xff]
  %v1368 = vld [vmem:[%s2 + $0x220] sm:$0xff]
  %v1369 = vld [vmem:[%s2 + $0x248] sm:$0xff]
  %v1370 = vld [vmem:[%s2 + $0x270] sm:$0xff]
  %v1372 = vsel %vm189, %v1333, 0
  %1374 = vmatprep.subr.mxu0 0.0
  %1375 = vmatpush1.msra.mxu0 0.0
  %1376 = vmatprep.subr.mxu0 0.0
  %1377 = vmatpush1.msra.mxu0 0.0
  %1378 = vmatprep.subr.mxu0 0.0
  %1379 = vmatpush1.msra.mxu0 0.0
  %1380 = vmatprep.subr.mxu0 0.0
  %1381 = vmatpush1.msra.mxu0 0.0
  %1382 = vmatprep.subr.mxu0 0.0
  %1383 = vmatpush1.msra.mxu0 0.0
  %1384 = vmatprep.subr.mxu0 0.0
  %1385 = vmatpush1.msra.mxu0 0.0
  %1386 = vmatprep.subr.mxu0 0.0
  %1387 = vmatpush1.msra.mxu0 0.0
  %1388 = vmatprep.subr.mxu0 0.0
  %1389 = vmatpush1.msra.mxu0 0.0
  %1390 = vmatprep.subr.mxu0 0.0
  %1391 = vmatpush1.msra.mxu0 %v1370
  %1392 = vmatprep.subr.mxu0 0.0
  %1393 = vmatpush1.msra.mxu0 %v1369
  %1394 = vmatprep.subr.mxu0 0.0
  %1395 = vmatpush1.msra.mxu0 %v1368
  %1396 = vmatprep.subr.mxu0 0.0
  %1397 = vmatpush1.msra.mxu0 %v1367
  %1398 = vmatprep.subr.mxu0 0.0
  %1399 = vmatpush1.msra.mxu0 %v1366
  %1400 = vmatprep.subr.mxu0 0.0
  %1401 = vmatpush1.msra.mxu0 %v1365
  %1402 = vmatprep.subr.mxu0 0.0
  %1403 = vmatpush1.msra.mxu0 %v1364
  %1404 = vmatprep.subr.mxu0 0.0
  %1405 = vmatpush1.msra.mxu0 %v1363
  %1406 = vmatprep.subr.mxu0 0.0
  %1407 = vmatpush2.msra.mxu0 0.0
  %1408 = vmatprep.subr.mxu0 0.0
  %1409 = vmatpush2.msra.mxu0 0.0
  %1410 = vmatprep.subr.mxu0 0.0
  %1411 = vmatpush2.msra.mxu0 0.0
  %1412 = vmatprep.subr.mxu0 0.0
  %1413 = vmatpush2.msra.mxu0 0.0
  %1414 = vmatprep.subr.mxu0 0.0
  %1415 = vmatpush2.msra.mxu0 0.0
  %1416 = vmatprep.subr.mxu0 0.0
  %1417 = vmatpush2.msra.mxu0 0.0
  %1418 = vmatprep.subr.mxu0 0.0
  %1419 = vmatpush2.msra.mxu0 0.0
  %1420 = vmatprep.subr.mxu0 0.0
  %1421 = vmatpush2.msra.mxu0 0.0
  %1422 = vmatprep.subr.mxu0 0.0
  %1423 = vmatpush2.msra.mxu0 0.0
  %1424 = vmatprep.subr.mxu0 0.0
  %1425 = vmatpush2.msra.mxu0 0.0
  %1426 = vmatprep.subr.mxu0 0.0
  %1427 = vmatpush2.msra.mxu0 0.0
  %1428 = vmatprep.subr.mxu0 0.0
  %1429 = vmatpush2.msra.mxu0 0.0
  %1430 = vmatprep.subr.mxu0 0.0
  %1431 = vmatpush2.msra.mxu0 0.0
  %1432 = vmatprep.subr.mxu0 0.0
  %1433 = vmatpush2.msra.mxu0 0.0
  %1434 = vmatprep.subr.mxu0 0.0
  %1435 = vmatpush2.msra.mxu0 0.0
  %1436 = vmatprep.subr.mxu0 0.0
  %1437 = vmatpush2.msra.mxu0 0.0
  %1438 = vmatprep.mubr.f32.mxu0 0.0
  %1439 = vmatmul.mubr.f32.gmra.mxu0 %v1372
  %v1440 = vpop.f32.mrf.mxu0
  %v1441 = vadd.f32 0.0, %v1440
  %v1442 = vpop.f32.mrf.mxu0
  %1443 = vdwg.mxu0
  %v1445 = vsel %vm189, %v1354, 0
  %1447 = vmatprep.subr.mxu0 0.0
  %1448 = vmatpush1.msra.mxu0 0.0
  %1449 = vmatprep.subr.mxu0 0.0
  %1450 = vmatpush1.msra.mxu0 0.0
  %1451 = vmatprep.subr.mxu0 0.0
  %1452 = vmatpush1.msra.mxu0 0.0
  %1453 = vmatprep.subr.mxu0 0.0
  %1454 = vmatpush1.msra.mxu0 0.0
  %1455 = vmatprep.subr.mxu0 0.0
  %1456 = vmatpush1.msra.mxu0 0.0
  %1457 = vmatprep.subr.mxu0 0.0
  %1458 = vmatpush1.msra.mxu0 0.0
  %1459 = vmatprep.subr.mxu0 0.0
  %1460 = vmatpush1.msra.mxu0 0.0
  %1461 = vmatprep.subr.mxu0 0.0
  %1462 = vmatpush1.msra.mxu0 0.0
  %1463 = vmatprep.subr.mxu0 0.0
  %1464 = vmatpush1.msra.mxu0 %v1362
  %1465 = vmatprep.subr.mxu0 0.0
  %1466 = vmatpush1.msra.mxu0 %v1361
  %1467 = vmatprep.subr.mxu0 0.0
  %1468 = vmatpush1.msra.mxu0 %v1360
  %1469 = vmatprep.subr.mxu0 0.0
  %1470 = vmatpush1.msra.mxu0 %v1359
  %1471 = vmatprep.subr.mxu0 0.0
  %1472 = vmatpush1.msra.mxu0 %v1358
  %1473 = vmatprep.subr.mxu0 0.0
  %1474 = vmatpush1.msra.mxu0 %v1357
  %1475 = vmatprep.subr.mxu0 0.0
  %1476 = vmatpush1.msra.mxu0 %v1356
  %1477 = vmatprep.subr.mxu0 0.0
  %1478 = vmatpush1.msra.mxu0 %v1355
  %1479 = vmatprep.subr.mxu0 0.0
  %1480 = vmatpush2.msra.mxu0 0.0
  %1481 = vmatprep.subr.mxu0 0.0
  %1482 = vmatpush2.msra.mxu0 0.0
  %1483 = vmatprep.subr.mxu0 0.0
  %1484 = vmatpush2.msra.mxu0 0.0
  %1485 = vmatprep.subr.mxu0 0.0
  %1486 = vmatpush2.msra.mxu0 0.0
  %1487 = vmatprep.subr.mxu0 0.0
  %1488 = vmatpush2.msra.mxu0 0.0
  %1489 = vmatprep.subr.mxu0 0.0
  %1490 = vmatpush2.msra.mxu0 0.0
  %1491 = vmatprep.subr.mxu0 0.0
  %1492 = vmatpush2.msra.mxu0 0.0
  %1493 = vmatprep.subr.mxu0 0.0
  %1494 = vmatpush2.msra.mxu0 0.0
  %1495 = vmatprep.subr.mxu0 0.0
  %1496 = vmatpush2.msra.mxu0 0.0
  %1497 = vmatprep.subr.mxu0 0.0
  %1498 = vmatpush2.msra.mxu0 0.0
  %1499 = vmatprep.subr.mxu0 0.0
  %1500 = vmatpush2.msra.mxu0 0.0
  %1501 = vmatprep.subr.mxu0 0.0
  %1502 = vmatpush2.msra.mxu0 0.0
  %1503 = vmatprep.subr.mxu0 0.0
  %1504 = vmatpush2.msra.mxu0 0.0
  %1505 = vmatprep.subr.mxu0 0.0
  %1506 = vmatpush2.msra.mxu0 0.0
  %1507 = vmatprep.subr.mxu0 0.0
  %1508 = vmatpush2.msra.mxu0 0.0
  %1509 = vmatprep.subr.mxu0 0.0
  %1510 = vmatpush2.msra.mxu0 0.0
  %1511 = vmatprep.mubr.f32.mxu0 0.0
  %1512 = vmatmul.mubr.f32.gmra.mxu0 %v1445
  %v1513 = vpop.f32.mrf.mxu0
  %v1514 = vadd.f32 %v1441, %v1513
  %v1515 = vpop.f32.mrf.mxu0
  %1516 = vdwg.mxu0
  %v1517 = vlaneseq
  %v1518 = vshrl.u32 %v1517, 7
  %v1519 = vsub.s32 0, %v1518
  %v1520 = vrot.slane %v28, %v1519
  %v1521 = vadd.f32 %v1514, %v1520
  %1522 = vst [vmem:[%s3] sm:$0xff] %v1521
  // Predicated region
  $region14: #{r_critic_meta_forward.1} parent=0 // pred_check
    _
  $region15: #{r_critic_meta_forward.1} parent=0 // pred_check_branch
    %1524 = sbr.rel (0) target = $region17
  $region16: #{r_critic_meta_forward.1} parent=0 // pred_region
    _
  $region17: #{r_critic_meta_forward.1} parent=0 // pred_fallthru
    _
  // Predicated region
  $region18: #{r_critic_meta_forward.1} parent=0 // pred_check
    _
  $region19: #{r_critic_meta_forward.1} parent=0 // pred_check_branch
    %1526 = sbr.rel (0) target = $region21
  $region20: #{r_critic_meta_forward.1} parent=0 // pred_region
    _
  $region21: #{r_critic_meta_forward.1} parent=0 // pred_fallthru
    _

</llo_original>
